<compile_context>
chip_gen: v5e
topology: v5e:2x2
jax: 0.10.0
libtpu: 0.0.40
codegen_flags: <defaults>
</compile_context>

<pallas_src>
import functools
import math

import jax
import jax.numpy as jnp
from jax.experimental import pallas as pl
from jax.experimental.pallas import tpu as pltpu


def _round_up(x, m):
    return ((x + m - 1) // m) * m


def _pick_tiles(n):
    """Row/K tile sizes: 256/512 by default, clamped for small graphs."""
    n128 = _round_up(n, 128)
    if n128 >= 512:
        return 256, 512
    if n128 >= 256:
        return 256, 256
    return 128, 128


# ---------------------------------------------------------------- kernel 1
def gcn_relu_kernel(a_ref, xw_ref, b1_ref, h_ref, acc_ref):
    """One (row-tile i, K-tile k) step of  H = relu(A_hat @ XW + b1)."""
    @pl.when(pl.program_id(1) == 0)
    def _init():
        acc_ref[...] = jnp.zeros_like(acc_ref)

    acc_ref[...] += jnp.dot(a_ref[...], xw_ref[...],
                            preferred_element_type=jnp.float32)

    @pl.when(pl.program_id(1) == pl.num_programs(1) - 1)
    def _finalize():
        # single wide lane-dense store per row tile
        h_ref[...] = jnp.maximum(acc_ref[...] + b1_ref[...], 0.0)


# ---------------------------------------------------------------- kernel 2
def score_gate_kernel(a_ref, hw_ref, h_ref, bs_ref, gated_ref, score_ref, acc_ref):
    """score = A_hat @ (H @ Ws) + bs ;  gated = H * tanh(score)  (fused)."""
    @pl.when(pl.program_id(1) == 0)
    def _init():
        acc_ref[...] = jnp.zeros_like(acc_ref)

    # matvec rides the otherwise-idle MXU; A_hat HBM traffic is the bottleneck
    acc_ref[...] += jnp.dot(a_ref[...], hw_ref[...],
                            preferred_element_type=jnp.float32)

    @pl.when(pl.program_id(1) == pl.num_programs(1) - 1)
    def _finalize():
        s = acc_ref[...] + bs_ref[0, 0]          # bs is an SMEM scalar
        score_ref[...] = s
        gated_ref[...] = h_ref[...] * jnp.tanh(s)  # tanh -> EUP slot (free)


# ---------------------------------------------------------------- wrapper
def conv_pool_block(a_hat, x, params, pool_ratio=0.8):
    w1, b1, ws, bs = params
    n = x.shape[0]
    f_out = w1.shape[1]

    tm, tk = _pick_tiles(n)
    n_pad = _round_up(n, tk)                 # tm divides tk by construction
    f_pad = _round_up(f_out, 128)            # lane-dense feature slabs
    grid = (n_pad // tm, n_pad // tk)

    # bf16 operands, f32 accumulation.  Zero padding is exact: padded A columns
    # are zero so padded nodes/features never pollute real rows.
    a_p = (jnp.zeros((n_pad, n_pad), jnp.float32)
           .at[:n, :n].set(a_hat).astype(jnp.bfloat16))

    # hoist XW = X @ W1 out of the per-row-tile loop (tiny, done once in XLA)
    xw = jnp.dot(x, w1)
    xw_p = (jnp.zeros((n_pad, f_pad), jnp.float32)
            .at[:n, :f_out].set(xw).astype(jnp.bfloat16))
    b1_p = jnp.zeros((1, f_pad), jnp.float32).at[:, :f_out].set(
        jnp.reshape(b1, (1, f_out)))

    cparams = pltpu.CompilerParams(
        dimension_semantics=("parallel", "arbitrary"),   # rows -> megacore
        vmem_limit_bytes=32 * 1024 * 1024)

    # ---- pass 1: H = relu(A_hat @ XW + b1) ------------------------------
    h_pad = pl.pallas_call(
        gcn_relu_kernel,
        grid=grid,
        in_specs=[
            pl.BlockSpec((tm, tk), lambda i, k: (i, k)),        # A_hat tile
            pl.BlockSpec((tk, f_pad), lambda i, k: (k, 0)),     # XW K-slice
            pl.BlockSpec((1, f_pad), lambda i, k: (0, 0)),      # b1
        ],
        out_specs=pl.BlockSpec((tm, f_pad), lambda i, k: (i, 0)),
        out_shape=jax.ShapeDtypeStruct((n_pad, f_pad), jnp.float32),
        scratch_shapes=[pltpu.VMEM((tm, f_pad), jnp.float32)],
        compiler_params=cparams,
    )(a_p, xw_p, b1_p)

    # hw = H @ Ws : tiny [N,F]@[F,1] matvec kept in XLA (off the kernel MXU path)
    hw_p = jnp.dot(h_pad[:, :f_out], ws).astype(jnp.bfloat16)   # [n_pad, 1]
    bs_p = jnp.asarray(bs, jnp.float32).reshape(1, 1)

    # ---- pass 2: score + fused tanh gating -------------------------------
    gated_pad, score_pad = pl.pallas_call(
        score_gate_kernel,
        grid=grid,
        in_specs=[
            pl.BlockSpec((tm, tk), lambda i, k: (i, k)),        # A_hat tile
            pl.BlockSpec((tk, 1), lambda i, k: (k, 0)),         # hw K-slice
            pl.BlockSpec((tm, f_pad), lambda i, k: (i, 0)),     # H row tile
            pl.BlockSpec(memory_space=pltpu.MemorySpace.SMEM),  # bs scalar
        ],
        out_specs=[
            pl.BlockSpec((tm, f_pad), lambda i, k: (i, 0)),     # gated (lane-dense)
            pl.BlockSpec((tm, 1), lambda i, k: (i, 0)),         # score
        ],
        out_shape=(
            jax.ShapeDtypeStruct((n_pad, f_pad), jnp.float32),
            jax.ShapeDtypeStruct((n_pad, 1), jnp.float32),
        ),
        scratch_shapes=[pltpu.VMEM((tm, 1), jnp.float32)],
        compiler_params=cparams,
    )(a_p, hw_p, h_pad, bs_p)

    score = score_pad[:n, 0]
    gated = gated_pad[:n, :f_out]

    # top-k(score, ratio) for a single graph, descending.
    k = max(1, int(math.ceil(pool_ratio * n)))
    _, perm = jax.lax.top_k(score, k)
    # gating already fused: (H * tanh(score))[perm] == H[perm] * tanh(score[perm])
    out_feat = gated[perm]
    # TODO(synk): dgl.node_subgraph (induced-subgraph object / batch bookkeeping)
    # has no Pallas equivalent; `perm` is returned in its place.

    # AvgPooling || MaxPooling readout over the kept k rows (plain JAX).
    g_out = jnp.concatenate(
        [jnp.mean(out_feat, axis=0, keepdims=True),
         jnp.max(out_feat, axis=0, keepdims=True)], axis=-1)
    return perm, out_feat, g_out


# ---------------------------------------------------------------- main
if __name__ == "__main__":
    key = jax.random.PRNGKey(0)
    N, IN_DIM, OUT_DIM = 384, 48, 32        # small, but big enough to tile (grid 2x2)
    POOL_RATIO = 0.8

    k_adj, k_x, k_w1, k_ws = jax.random.split(key, 4)

    # Random symmetric adjacency with self loops, symmetric normalization.
    a_raw = (jax.random.uniform(k_adj, (N, N)) > 0.7).astype(jnp.float32)
    a_sym = jnp.clip(a_raw + a_raw.T + jnp.eye(N, dtype=jnp.float32), 0.0, 1.0)
    deg = jnp.sum(a_sym, axis=1)
    d_inv_sqrt = 1.0 / jnp.sqrt(deg)
    a_hat = a_sym * d_inv_sqrt[:, None] * d_inv_sqrt[None, :]

    x = jax.random.normal(k_x, (N, IN_DIM), dtype=jnp.float32)

    # GraphConv(in_dim, out_dim): W1 [in,out], b1 [out]; GraphConv(out_dim,1): Ws, bs
    lim1 = math.sqrt(6.0 / (IN_DIM + OUT_DIM))
    w1 = jax.random.uniform(k_w1, (IN_DIM, OUT_DIM),
                            minval=-lim1, maxval=lim1).astype(jnp.float32)
    b1 = jnp.zeros((1, OUT_DIM), dtype=jnp.float32)
    lims = math.sqrt(6.0 / (OUT_DIM + 1))
    ws = jax.random.uniform(k_ws, (OUT_DIM, 1),
                            minval=-lims, maxval=lims).astype(jnp.float32)
    bs = jnp.zeros((1, 1), dtype=jnp.float32)

    block = jax.jit(functools.partial(conv_pool_block, pool_ratio=POOL_RATIO))
    perm, out_feat, g_out = block(a_hat, x, (w1, b1, ws, bs))
    jax.block_until_ready((perm, out_feat, g_out))

    # ---- correctness check vs. pure-JAX f32 reference --------------------
    # (elementwise; uses the kernel's perm so the check is robust to bf16-induced
    #  ties in the top-k ordering)
    h_ref = jax.nn.relu(a_hat @ (x @ w1) + b1)
    score_ref = (a_hat @ (h_ref @ ws) + bs)[:, 0]
    gated_ref = h_ref * jnp.tanh(score_ref)[:, None]
    ref_feat = gated_ref[perm]
    ref_gout = jnp.concatenate([jnp.mean(ref_feat, axis=0, keepdims=True),
                                jnp.max(ref_feat, axis=0, keepdims=True)], axis=-1)

    k_keep = int(math.ceil(POOL_RATIO * N))
    assert perm.shape == (k_keep,)
    assert out_feat.shape == (k_keep, OUT_DIM)
    assert g_out.shape == (1, 2 * OUT_DIM)
    assert bool(jnp.allclose(out_feat, ref_feat, atol=3e-2, rtol=3e-2))
    assert bool(jnp.allclose(g_out, ref_gout, atol=3e-2, rtol=3e-2))
    print("KERNEL_OK")
</pallas_src>

<mosaic_0001>
module attributes {stable_mosaic.version = 11 : i64} {
  func.func @gcn_relu_kernel(%arg0: i32, %arg1: i32, %arg2: memref<256x256xbf16, #tpu.memory_space<vmem>>, %arg3: memref<256x128xbf16, #tpu.memory_space<vmem>>, %arg4: memref<1x128xf32, #tpu.memory_space<vmem>>, %arg5: memref<256x128xf32, #tpu.memory_space<vmem>>, %arg6: memref<256x128xf32, #tpu.memory_space<vmem>>) attributes {dimension_semantics = [#tpu.dimension_semantics<parallel>, #tpu.dimension_semantics<arbitrary>], iteration_bounds = array<i64: 2, 2>, scalar_prefetch = 0 : i64, scratch_operands = 1 : i64, tpu.core_type = #tpu.core_type<tc>, window_params = [{transform_indices = @transform_0, window_bounds = array<i64: 256, 256>}, {transform_indices = @transform_1, window_bounds = array<i64: 256, 128>}, {pipeline_mode = #tpu.pipeline_mode<synchronous>, transform_indices = @transform_2, window_bounds = array<i64: 1, 128>}, {transform_indices = @transform_3, window_bounds = array<i64: 256, 128>}]} {
    %c0_i32 = arith.constant 0 : i32
    %0 = arith.cmpi eq, %arg1, %c0_i32 : i32
    %1 = arith.extui %0 : i1 to i32
    %c0_i32_0 = arith.constant 0 : i32
    %2 = arith.cmpi ne, %1, %c0_i32_0 : i32
    scf.if %2 {
      %cst_9 = arith.constant 0.000000e+00 : f32
      %12 = vector.broadcast %cst_9 : f32 to vector<256x128xf32>
      %c0_10 = arith.constant 0 : index
      %c0_11 = arith.constant 0 : index
      %13 = vector.load %arg6[%c0_10, %c0_11] : memref<256x128xf32, #tpu.memory_space<vmem>>, vector<256x128xf32>
      tpu.vector_store %arg6[%c0_10, %c0_11], %12 {strides = array<i32>} : memref<256x128xf32, #tpu.memory_space<vmem>>, vector<256x128xf32>,
    } else {
    }
    %c0 = arith.constant 0 : index
    %c0_1 = arith.constant 0 : index
    %3 = vector.load %arg6[%c0, %c0_1] : memref<256x128xf32, #tpu.memory_space<vmem>>, vector<256x128xf32>
    %c0_2 = arith.constant 0 : index
    %c0_3 = arith.constant 0 : index
    %4 = vector.load %arg2[%c0_2, %c0_3] : memref<256x256xbf16, #tpu.memory_space<vmem>>, vector<256x256xbf16>
    %c0_4 = arith.constant 0 : index
    %c0_5 = arith.constant 0 : index
    %5 = vector.load %arg3[%c0_4, %c0_5] : memref<256x128xbf16, #tpu.memory_space<vmem>>, vector<256x128xbf16>
    %cst = arith.constant dense<0.000000e+00> : vector<256x128xf32>
    %6 = tpu.matmul %4, %5, %cst {dimension_numbers = #tpu.dot_dimension_numbers<[1], [0], [0], [1], [0, 0, 1, 1], [], []>} : vector<256x256xbf16>, vector<256x128xbf16>, vector<256x128xf32> -> vector<256x128xf32>
    %7 = arith.addf %3, %6 : vector<256x128xf32>
    %c0_6 = arith.constant 0 : index
    %c0_7 = arith.constant 0 : index
    %8 = vector.load %arg6[%c0_6, %c0_7] : memref<256x128xf32, #tpu.memory_space<vmem>>, vector<256x128xf32>
    tpu.vector_store %arg6[%c0_6, %c0_7], %7 {strides = array<i32>} : memref<256x128xf32, #tpu.memory_space<vmem>>, vector<256x128xf32>,
    %c1_i32 = arith.constant 1 : i32
    %9 = arith.cmpi eq, %arg1, %c1_i32 : i32
    %10 = arith.extui %9 : i1 to i32
    %c0_i32_8 = arith.constant 0 : i32
    %11 = arith.cmpi ne, %10, %c0_i32_8 : i32
    scf.if %11 {
      %c0_9 = arith.constant 0 : index
      %c0_10 = arith.constant 0 : index
      %12 = vector.load %arg6[%c0_9, %c0_10] : memref<256x128xf32, #tpu.memory_space<vmem>>, vector<256x128xf32>
      %c0_11 = arith.constant 0 : index
      %c0_12 = arith.constant 0 : index
      %13 = vector.load %arg4[%c0_11, %c0_12] : memref<1x128xf32, #tpu.memory_space<vmem>>, vector<1x128xf32>
      %14 = vector.broadcast %13 : vector<1x128xf32> to vector<256x128xf32>
      %15 = arith.addf %12, %14 : vector<256x128xf32>
      %cst_13 = arith.constant 0.000000e+00 : f32
      %16 = vector.broadcast %cst_13 : f32 to vector<256x128xf32>
      %17 = arith.maximumf %15, %16 : vector<256x128xf32>
      %c0_14 = arith.constant 0 : index
      %c0_15 = arith.constant 0 : index
      %18 = vector.load %arg5[%c0_14, %c0_15] : memref<256x128xf32, #tpu.memory_space<vmem>>, vector<256x128xf32>
      tpu.vector_store %arg5[%c0_14, %c0_15], %17 {strides = array<i32>} : memref<256x128xf32, #tpu.memory_space<vmem>>, vector<256x128xf32>,
    } else {
    }
    return
  }
  func.func @transform_0(%arg0: i32, %arg1: i32) -> (i32, i32) {
    %c0_i32 = arith.constant 0 : i32
    return %arg0, %arg1 : i32, i32
  }
  func.func @transform_1(%arg0: i32, %arg1: i32) -> (i32, i32) {
    %c0_i32 = arith.constant 0 : i32
    %c0_i32_0 = arith.constant 0 : i32
    return %arg1, %c0_i32 : i32, i32
  }
  func.func @transform_2(%arg0: i32, %arg1: i32) -> (i32, i32) {
    %c0_i32 = arith.constant 0 : i32
    %c0_i32_0 = arith.constant 0 : i32
    %c0_i32_1 = arith.constant 0 : i32
    return %c0_i32, %c0_i32_0 : i32, i32
  }
  func.func @transform_3(%arg0: i32, %arg1: i32) -> (i32, i32) {
    %c0_i32 = arith.constant 0 : i32
    %c0_i32_0 = arith.constant 0 : i32
    return %arg0, %c0_i32 : i32, i32
  }
}

module attributes {stable_mosaic.version = 11 : i64} {
  func.func @score_gate_kernel(%arg0: i32, %arg1: i32, %arg2: memref<256x256xbf16, #tpu.memory_space<vmem>>, %arg3: memref<256x1xbf16, #tpu.memory_space<vmem>>, %arg4: memref<256x128xf32, #tpu.memory_space<vmem>>, %arg5: memref<1x1xf32, #tpu.memory_space<smem>>, %arg6: memref<256x128xf32, #tpu.memory_space<vmem>>, %arg7: memref<256x1xf32, #tpu.memory_space<vmem>>, %arg8: memref<256x1xf32, #tpu.memory_space<vmem>>) attributes {dimension_semantics = [#tpu.dimension_semantics<parallel>, #tpu.dimension_semantics<arbitrary>], iteration_bounds = array<i64: 2, 2>, scalar_prefetch = 0 : i64, scratch_operands = 1 : i64, tpu.core_type = #tpu.core_type<tc>, window_params = [{transform_indices = @transform_0, window_bounds = array<i64: 256, 256>}, {transform_indices = @transform_1, window_bounds = array<i64: 256, 1>}, {transform_indices = @transform_2, window_bounds = array<i64: 256, 128>}, {transform_indices = @transform_3, window_bounds = array<i64: 1, 1>}, {transform_indices = @transform_4, window_bounds = array<i64: 256, 128>}, {transform_indices = @transform_5, window_bounds = array<i64: 256, 1>}]} {
    %c0_i32 = arith.constant 0 : i32
    %0 = arith.cmpi eq, %arg1, %c0_i32 : i32
    %1 = arith.extui %0 : i1 to i32
    %c0_i32_0 = arith.constant 0 : i32
    %2 = arith.cmpi ne, %1, %c0_i32_0 : i32
    scf.if %2 {
      %cst_9 = arith.constant 0.000000e+00 : f32
      %12 = vector.broadcast %cst_9 : f32 to vector<256x1xf32>
      %c0_10 = arith.constant 0 : index
      %c0_11 = arith.constant 0 : index
      %13 = vector.load %arg8[%c0_10, %c0_11] : memref<256x1xf32, #tpu.memory_space<vmem>>, vector<256x1xf32>
      tpu.vector_store %arg8[%c0_10, %c0_11], %12 {strides = array<i32>} : memref<256x1xf32, #tpu.memory_space<vmem>>, vector<256x1xf32>,
    } else {
    }
    %c0 = arith.constant 0 : index
    %c0_1 = arith.constant 0 : index
    %3 = vector.load %arg8[%c0, %c0_1] : memref<256x1xf32, #tpu.memory_space<vmem>>, vector<256x1xf32>
    %c0_2 = arith.constant 0 : index
    %c0_3 = arith.constant 0 : index
    %4 = vector.load %arg2[%c0_2, %c0_3] : memref<256x256xbf16, #tpu.memory_space<vmem>>, vector<256x256xbf16>
    %c0_4 = arith.constant 0 : index
    %c0_5 = arith.constant 0 : index
    %5 = vector.load %arg3[%c0_4, %c0_5] : memref<256x1xbf16, #tpu.memory_space<vmem>>, vector<256x1xbf16>
    %cst = arith.constant dense<0.000000e+00> : vector<256x1xf32>
    %6 = tpu.matmul %4, %5, %cst {dimension_numbers = #tpu.dot_dimension_numbers<[1], [0], [0], [1], [0, 0, 1, 1], [], []>} : vector<256x256xbf16>, vector<256x1xbf16>, vector<256x1xf32> -> vector<256x1xf32>
    %7 = arith.addf %3, %6 : vector<256x1xf32>
    %c0_6 = arith.constant 0 : index
    %c0_7 = arith.constant 0 : index
    %8 = vector.load %arg8[%c0_6, %c0_7] : memref<256x1xf32, #tpu.memory_space<vmem>>, vector<256x1xf32>
    tpu.vector_store %arg8[%c0_6, %c0_7], %7 {strides = array<i32>} : memref<256x1xf32, #tpu.memory_space<vmem>>, vector<256x1xf32>,
    %c1_i32 = arith.constant 1 : i32
    %9 = arith.cmpi eq, %arg1, %c1_i32 : i32
    %10 = arith.extui %9 : i1 to i32
    %c0_i32_8 = arith.constant 0 : i32
    %11 = arith.cmpi ne, %10, %c0_i32_8 : i32
    scf.if %11 {
      %c0_9 = arith.constant 0 : index
      %c0_10 = arith.constant 0 : index
      %12 = vector.load %arg8[%c0_9, %c0_10] : memref<256x1xf32, #tpu.memory_space<vmem>>, vector<256x1xf32>
      %c0_11 = arith.constant 0 : index
      %c0_12 = arith.constant 0 : index
      %13 = memref.load %arg5[%c0_11, %c0_12] : memref<1x1xf32, #tpu.memory_space<smem>>
      %14 = vector.broadcast %13 : f32 to vector<256x1xf32>
      %15 = arith.addf %12, %14 : vector<256x1xf32>
      %c0_13 = arith.constant 0 : index
      %c0_14 = arith.constant 0 : index
      %16 = vector.load %arg7[%c0_13, %c0_14] : memref<256x1xf32, #tpu.memory_space<vmem>>, vector<256x1xf32>
      tpu.vector_store %arg7[%c0_13, %c0_14], %15 {strides = array<i32>} : memref<256x1xf32, #tpu.memory_space<vmem>>, vector<256x1xf32>,
      %c0_15 = arith.constant 0 : index
      %c0_16 = arith.constant 0 : index
      %17 = vector.load %arg4[%c0_15, %c0_16] : memref<256x128xf32, #tpu.memory_space<vmem>>, vector<256x128xf32>
      %18 = math.tanh %15 : vector<256x1xf32>
      %19 = vector.broadcast %18 : vector<256x1xf32> to vector<256x128xf32>
      %20 = arith.mulf %17, %19 : vector<256x128xf32>
      %c0_17 = arith.constant 0 : index
      %c0_18 = arith.constant 0 : index
      %21 = vector.load %arg6[%c0_17, %c0_18] : memref<256x128xf32, #tpu.memory_space<vmem>>, vector<256x128xf32>
      tpu.vector_store %arg6[%c0_17, %c0_18], %20 {strides = array<i32>} : memref<256x128xf32, #tpu.memory_space<vmem>>, vector<256x128xf32>,
    } else {
    }
    return
  }
  func.func @transform_0(%arg0: i32, %arg1: i32) -> (i32, i32) {
    %c0_i32 = arith.constant 0 : i32
    return %arg0, %arg1 : i32, i32
  }
  func.func @transform_1(%arg0: i32, %arg1: i32) -> (i32, i32) {
    %c0_i32 = arith.constant 0 : i32
    %c0_i32_0 = arith.constant 0 : i32
    return %arg1, %c0_i32 : i32, i32
  }
  func.func @transform_2(%arg0: i32, %arg1: i32) -> (i32, i32) {
    %c0_i32 = arith.constant 0 : i32
    %c0_i32_0 = arith.constant 0 : i32
    return %arg0, %c0_i32 : i32, i32
  }
  func.func @transform_3(%arg0: i32, %arg1: i32) -> (i32, i32) {
    %c0_i32 = arith.constant 0 : i32
    %c0_i32_0 = arith.constant 0 : i32
    %c0_i32_1 = arith.constant 0 : i32
    return %c0_i32, %c0_i32_0 : i32, i32
  }
  func.func @transform_4(%arg0: i32, %arg1: i32) -> (i32, i32) {
    %c0_i32 = arith.constant 0 : i32
    %c0_i32_0 = arith.constant 0 : i32
    return %arg0, %c0_i32 : i32, i32
  }
  func.func @transform_5(%arg0: i32, %arg1: i32) -> (i32, i32) {
    %c0_i32 = arith.constant 0 : i32
    %c0_i32_0 = arith.constant 0 : i32
    return %arg0, %c0_i32 : i32, i32
  }
}

</mosaic_0001>

<llo_original>
// kernel: conv_pool_block.2
$region0: #{conv_pool_block.2}
  #allocation0 [shape = 'u32[]', space=smem, size = 0x4, offset = 0x4, fixed_abs, tag = 'smem constant byte address 0x4 - core index']
  #allocation1 [shape = 'u32[72,128]{1,0:T(1,128)}', space=vmem, size = 0x9000, scoped, tag = 'internal scratch']
  #allocation2 [shape = 'f32[256,128]{1,0:T(8,128)}', space=vmem, size = 0x20000, scoped, tag = 'scratch operand']
  %s0 = inlined_call_operand.vmem [shape: bf16[512,512], index: 0, kind: input, shape index: {}]
  %s1 = inlined_call_operand.vmem [shape: bf16[512,128], index: 1, kind: input, shape index: {}]
  %s2 = inlined_call_operand.vmem [shape: f32[1,128], index: 2, kind: input, shape index: {}]
  %s3 = inlined_call_operand.vmem [shape: f32[512,128], index: 3, kind: output, shape index: {}]
  %s4 = sld [smem:[#allocation0]]
  $region91: #{conv_pool_block.2} parent=0
    _
  %s6 = ssub.s32 1, %s4
  %s7 = scalar_select 0, %s6, %s4
  $region1: #{conv_pool_block.2} parent=0
    #allocation3 [shape = 'u8[262144]{0}', space=vmem, size = 0x40000, scoped, tag = 'input window, operand 0']
    loop: start=0, step=1, limit=6
    $region2: #{conv_pool_block.2} parent=1 // loop_pre_header
      _
    $region3: #{conv_pool_block.2} parent=1 // loop_header
      %s9 = sphi 0, %s13
      %p10 = scmp.ge.s32.totalorder %s9, 6
      %s16 = sphi 0, %s28
      %s17 = sphi 0, %s24
      %s18 = sphi 0, %s16
      %s19 = sphi 0, %s17
      %s20 = sphi 0, %s18
      %s21 = sphi 0, %s19
      %s33 = sphi 0, %s35
      %s36 = sphi 0, %s33
      %s37 = sphi 0, %s36
      %s53 = sphi 0, %s37
      %s59 = sphi 0, %s61
      %s62 = sphi 0, %s59
      %s63 = sphi 0, %s62
      %s79 = sphi 0, %s63
      %s83 = sphi 0, %s83
      %s85 = sphi 0, %s83
      %s86 = sphi 0, %s85
      %s100 = sphi 0, %s86
      %s106 = sphi 0, %s108
      %s109 = sphi 0, %s106
      %s110 = sphi 0, %s109
      %s126 = sphi 0, %s110
    $region4: #{conv_pool_block.2} parent=1 // loop_header_branch
      %12 = sbr.rel (%p10) target = $region8
    $region5: #{conv_pool_block.2} parent=1 // loop_body
      %s14 = ssub.s32 %s9, 1
      %s15 = ssub.s32 %s9, 2
      %s22 = sadd.s32 1, %s17
      %p23 = scmp.ge.s32.totalorder %s22, 2
      %s24 = scalar_select %p23, 0, %s22
      %s25 = sadd.s32 1, %s16
      %s26 = scalar_select %p23, %s25, %s16
      %p27 = scmp.ge.s32.totalorder %s26, 2
      %s28 = scalar_select %p27, 0, %s26
      %s29 = ssub.s32 %s16, %s28
      %s30 = ssub.s32 %s17, %s24
      %s31 = sor.u32 %s29, %s30
      %p32 = scmp.eq.s32.totalorder %s31, 0
      %s34 = sadd.s32 %s33, 1
      %s35 = scalar_select %p32, %s33, %s34
      %p38 = pneg %p32
      %p39 = scmp.eq.s32.totalorder %s9, 3
      %p40 = por %p38, %p39
      %p41 = scmp.ne.s32.totalorder %s33, %s36
      %p42 = scmp.eq.s32.totalorder %s9, 0
      %p43 = por %p41, %p42
      %p44 = scmp.ne.s32.totalorder %s33, %s36
      %p45 = scmp.eq.s32.totalorder %s14, 3
      %p46 = por %p44, %p45
      %p47 = scmp.ne.s32.totalorder %s36, %s37
      %p48 = scmp.eq.s32.totalorder %s14, 0
      %p49 = por %p47, %p48
      %p50 = scmp.ne.s32.totalorder %s36, %s37
      %p51 = scmp.eq.s32.totalorder %s15, 3
      %p52 = por %p50, %p51
      %p54 = scmp.ne.s32.totalorder %s37, %s53
      %p55 = scmp.eq.s32.totalorder %s15, 0
      %p56 = por %p54, %p55
      %s57 = ssub.s32 %s17, %s24
      %p58 = scmp.eq.s32.totalorder %s57, 0
      %s60 = sadd.s32 %s59, 1
      %s61 = scalar_select %p58, %s59, %s60
      %p64 = pneg %p58
      %p65 = scmp.eq.s32.totalorder %s9, 3
      %p66 = por %p64, %p65
      %p67 = scmp.ne.s32.totalorder %s59, %s62
      %p68 = scmp.eq.s32.totalorder %s9, 0
      %p69 = por %p67, %p68
      %p70 = scmp.ne.s32.totalorder %s59, %s62
      %p71 = scmp.eq.s32.totalorder %s14, 3
      %p72 = por %p70, %p71
      %p73 = scmp.ne.s32.totalorder %s62, %s63
      %p74 = scmp.eq.s32.totalorder %s14, 0
      %p75 = por %p73, %p74
      %p76 = scmp.ne.s32.totalorder %s62, %s63
      %p77 = scmp.eq.s32.totalorder %s15, 3
      %p78 = por %p76, %p77
      %p80 = scmp.ne.s32.totalorder %s63, %s79
      %p81 = scmp.eq.s32.totalorder %s15, 0
      %p82 = por %p80, %p81
      %s84 = sadd.s32 %s83, 1
      %p87 = scmp.eq.s32.totalorder %s9, 3
      %p88 = scmp.ne.s32.totalorder %s83, %s85
      %p89 = scmp.eq.s32.totalorder %s9, 0
      %p90 = por %p88, %p89
      %p91 = scmp.ne.s32.totalorder %s83, %s85
      %p92 = scmp.eq.s32.totalorder %s14, 3
      %p93 = por %p91, %p92
      %p94 = scmp.ne.s32.totalorder %s85, %s86
      %p95 = scmp.eq.s32.totalorder %s14, 0
      %p96 = por %p94, %p95
      %p97 = scmp.ne.s32.totalorder %s85, %s86
      %p98 = scmp.eq.s32.totalorder %s15, 3
      %p99 = por %p97, %p98
      %p101 = scmp.ne.s32.totalorder %s86, %s100
      %p102 = scmp.eq.s32.totalorder %s15, 0
      %p103 = por %p101, %p102
      %s104 = ssub.s32 %s16, %s28
      %p105 = scmp.eq.s32.totalorder %s104, 0
      %s107 = sadd.s32 %s106, 1
      %s108 = scalar_select %p105, %s106, %s107
      %p111 = pneg %p105
      %p112 = scmp.eq.s32.totalorder %s9, 3
      %p113 = por %p111, %p112
      %p114 = scmp.ne.s32.totalorder %s106, %s109
      %p115 = scmp.eq.s32.totalorder %s9, 0
      %p116 = por %p114, %p115
      %p117 = scmp.ne.s32.totalorder %s106, %s109
      %p118 = scmp.eq.s32.totalorder %s14, 3
      %p119 = por %p117, %p118
      %p120 = scmp.ne.s32.totalorder %s109, %s110
      %p121 = scmp.eq.s32.totalorder %s14, 0
      %p122 = por %p120, %p121
      %p123 = scmp.ne.s32.totalorder %s109, %s110
      %p124 = scmp.eq.s32.totalorder %s15, 3
      %p125 = por %p123, %p124
      %p127 = scmp.ne.s32.totalorder %s110, %s126
      %p128 = scmp.eq.s32.totalorder %s15, 0
      %p129 = por %p127, %p128
      %p130 = scmp.le.s32.totalorder 1, %s9
      %p131 = scmp.lt.s32.totalorder %s9, 5
      %p132 = pnand %p130, %p131
      %p133 = pneg %p132
      // Predicated region
      $region9: #{conv_pool_block.2} parent=5 // pred_check
        _
      $region10: #{conv_pool_block.2} parent=5 // pred_check_branch
        %135 = sbr.rel (%p132) target = $region12
      $region11: #{conv_pool_block.2} parent=5 // pred_region
        %s136 = ssub.s32 %s9, 1
        // Predicated region
        $region13: #{conv_pool_block.2} parent=11 // pred_check
          %p137 = pneg %p96
        $region14: #{conv_pool_block.2} parent=11 // pred_check_branch
          %139 = sbr.rel (%p137) target = $region16
        $region15: #{conv_pool_block.2} parent=11 // pred_region
          _
        $region16: #{conv_pool_block.2} parent=11 // pred_fallthru
          _
      $region12: #{conv_pool_block.2} parent=5 // pred_fallthru
        _
      %p140 = scmp.lt.s32.totalorder %s9, 4
      // Predicated region
      $region17: #{conv_pool_block.2} parent=5 // pred_check
        %p141 = pneg %p140
      $region18: #{conv_pool_block.2} parent=5 // pred_check_branch
        %143 = sbr.rel (%p141) target = $region20
      $region19: #{conv_pool_block.2} parent=5 // pred_region
        // Predicated region
        $region21: #{conv_pool_block.2} parent=19 // pred_check
          %p144 = pneg %p43
        $region22: #{conv_pool_block.2} parent=19 // pred_check_branch
          %146 = sbr.rel (%p144) target = $region24
        $region23: #{conv_pool_block.2} parent=19 // pred_region
          %s147 = sand.u32 %s33, 1
          %s148 = sand.u32 %s33, 1
          %s149 = smul.addr %s148, 256
          %s150 = scalar_lea.vmem [#allocation3], %s149
          %s151 = smul.u32 32, %s16
          %s152 = smul.u32 2, %s17
          %s153 = smul.addr %s151, 4
          %s154 = sadd.s32 %s152, %s153
          %s155 = smul.addr %s154, 4
          %s156 = scalar_lea.vmem %s0, %s155
          // Predicated region
          $region25: #{conv_pool_block.2} parent=23 // pred_check
            _
          $region26: #{conv_pool_block.2} parent=23 // pred_check_branch
            %158 = sbr.rel (0) target = $region28
          $region27: #{conv_pool_block.2} parent=23 // pred_region
            // Predicated region
            $region29: #{conv_pool_block.2} parent=27 // pred_check
              _
            $region30: #{conv_pool_block.2} parent=27 // pred_check_branch
              %160 = sbr.rel (0) target = $region32
            $region31: #{conv_pool_block.2} parent=27 // pred_region
              // Predicated region
              $region44: #{conv_pool_block.2} parent=31 // pred_check
                _
              $region45: #{conv_pool_block.2} parent=31 // pred_check_branch
                %238 = sbr.rel (0) target = $region47
              $region46: #{conv_pool_block.2} parent=31 // pred_region
                loop: start=0, step=1, limit=1
                $region48: #{conv_pool_block.2} parent=46 // loop_pre_header
                  _
                $region49: #{conv_pool_block.2} parent=46 // loop_header
                  %s240 = sphi 0, %s244
                  %p241 = scmp.ge.s32.totalorder %s240, 1
                  %s245 = sphi %s156, %s156
                  %s246 = sphi %s150, %s150
                $region50: #{conv_pool_block.2} parent=46 // loop_header_branch
                  %243 = sbr.rel (%p241) target = $region54
                $region51: #{conv_pool_block.2} parent=46 // loop_body
                  %v247 = vld [vmem:[%s245] sm:$0xff]
                  %248 = vst [vmem:[%s246] sm:$0xff] %v247
                  %v249 = vld [vmem:[%s245 + $0x10] sm:$0xff]
                  %250 = vst [vmem:[%s246 + $0x8] sm:$0xff] %v249
                  %v251 = vld [vmem:[%s245 + $0x20] sm:$0xff]
                  %252 = vst [vmem:[%s246 + $0x10] sm:$0xff] %v251
                  %v253 = vld [vmem:[%s245 + $0x30] sm:$0xff]
                  %254 = vst [vmem:[%s246 + $0x18] sm:$0xff] %v253
                  %v255 = vld [vmem:[%s245 + $0x40] sm:$0xff]
                  %256 = vst [vmem:[%s246 + $0x20] sm:$0xff] %v255
                  %v257 = vld [vmem:[%s245 + $0x50] sm:$0xff]
                  %258 = vst [vmem:[%s246 + $0x28] sm:$0xff] %v257
                  %v259 = vld [vmem:[%s245 + $0x60] sm:$0xff]
                  %260 = vst [vmem:[%s246 + $0x30] sm:$0xff] %v259
                  %v261 = vld [vmem:[%s245 + $0x70] sm:$0xff]
                  %262 = vst [vmem:[%s246 + $0x38] sm:$0xff] %v261
                  %v263 = vld [vmem:[%s245 + $0x80] sm:$0xff]
                  %264 = vst [vmem:[%s246 + $0x40] sm:$0xff] %v263
                  %v265 = vld [vmem:[%s245 + $0x90] sm:$0xff]
                  %266 = vst [vmem:[%s246 + $0x48] sm:$0xff] %v265
                  %v267 = vld [vmem:[%s245 + $0xa0] sm:$0xff]
                  %268 = vst [vmem:[%s246 + $0x50] sm:$0xff] %v267
                  %v269 = vld [vmem:[%s245 + $0xb0] sm:$0xff]
                  %270 = vst [vmem:[%s246 + $0x58] sm:$0xff] %v269
                  %v271 = vld [vmem:[%s245 + $0xc0] sm:$0xff]
                  %272 = vst [vmem:[%s246 + $0x60] sm:$0xff] %v271
                  %v273 = vld [vmem:[%s245 + $0xd0] sm:$0xff]
                  %274 = vst [vmem:[%s246 + $0x68] sm:$0xff] %v273
                  %v275 = vld [vmem:[%s245 + $0xe0] sm:$0xff]
                  %276 = vst [vmem:[%s246 + $0x70] sm:$0xff] %v275
                  %v277 = vld [vmem:[%s245 + $0xf0] sm:$0xff]
                  %278 = vst [vmem:[%s246 + $0x78] sm:$0xff] %v277
                  %v279 = vld [vmem:[%s245 + $0x100] sm:$0xff]
                  %280 = vst [vmem:[%s246 + $0x80] sm:$0xff] %v279
                  %v281 = vld [vmem:[%s245 + $0x110] sm:$0xff]
                  %282 = vst [vmem:[%s246 + $0x88] sm:$0xff] %v281
                  %v283 = vld [vmem:[%s245 + $0x120] sm:$0xff]
                  %284 = vst [vmem:[%s246 + $0x90] sm:$0xff] %v283
                  %v285 = vld [vmem:[%s245 + $0x130] sm:$0xff]
                  %286 = vst [vmem:[%s246 + $0x98] sm:$0xff] %v285
                  %v287 = vld [vmem:[%s245 + $0x140] sm:$0xff]
                  %288 = vst [vmem:[%s246 + $0xa0] sm:$0xff] %v287
                  %v289 = vld [vmem:[%s245 + $0x150] sm:$0xff]
                  %290 = vst [vmem:[%s246 + $0xa8] sm:$0xff] %v289
                  %v291 = vld [vmem:[%s245 + $0x160] sm:$0xff]
                  %292 = vst [vmem:[%s246 + $0xb0] sm:$0xff] %v291
                  %v293 = vld [vmem:[%s245 + $0x170] sm:$0xff]
                  %294 = vst [vmem:[%s246 + $0xb8] sm:$0xff] %v293
                  %v295 = vld [vmem:[%s245 + $0x180] sm:$0xff]
                  %296 = vst [vmem:[%s246 + $0xc0] sm:$0xff] %v295
                  %v297 = vld [vmem:[%s245 + $0x190] sm:$0xff]
                  %298 = vst [vmem:[%s246 + $0xc8] sm:$0xff] %v297
                  %v299 = vld [vmem:[%s245 + $0x1a0] sm:$0xff]
                  %300 = vst [vmem:[%s246 + $0xd0] sm:$0xff] %v299
                  %v301 = vld [vmem:[%s245 + $0x1b0] sm:$0xff]
                  %302 = vst [vmem:[%s246 + $0xd8] sm:$0xff] %v301
                  %v303 = vld [vmem:[%s245 + $0x1c0] sm:$0xff]
                  %304 = vst [vmem:[%s246 + $0xe0] sm:$0xff] %v303
                  %v305 = vld [vmem:[%s245 + $0x1d0] sm:$0xff]
                  %306 = vst [vmem:[%s246 + $0xe8] sm:$0xff] %v305
                  %v307 = vld [vmem:[%s245 + $0x1e0] sm:$0xff]
                  %308 = vst [vmem:[%s246 + $0xf0] sm:$0xff] %v307
                  %v309 = vld [vmem:[%s245 + $0x1f0] sm:$0xff]
                  %310 = vst [vmem:[%s246 + $0xf8] sm:$0xff] %v309
                $region52: #{conv_pool_block.2} parent=46 // loop_footer
                  %s244 = sadd.s32 1, %s240
                $region53: #{conv_pool_block.2} parent=46 // loop_footer_branch
                  %239 = sbr.rel target = $region49
                $region54: #{conv_pool_block.2} parent=46 // loop_exit
                  _
              $region47: #{conv_pool_block.2} parent=31 // pred_fallthru
                _
              // Predicated region
              $region55: #{conv_pool_block.2} parent=31 // pred_check
                _
              $region56: #{conv_pool_block.2} parent=31 // pred_check_branch
                %312 = sbr.rel target = $region58
              $region57: #{conv_pool_block.2} parent=31 // pred_region
                _
              $region58: #{conv_pool_block.2} parent=31 // pred_fallthru
                _
            $region32: #{conv_pool_block.2} parent=27 // pred_fallthru
              _
            // Predicated region
            $region33: #{conv_pool_block.2} parent=27 // pred_check
              _
            $region34: #{conv_pool_block.2} parent=27 // pred_check_branch
              %162 = sbr.rel target = $region36
            $region35: #{conv_pool_block.2} parent=27 // pred_region
              %s164 = ssub.s32 256, 1
              loop: start=0, step=1, limit=1
              $region37: #{conv_pool_block.2} parent=35 // loop_pre_header
                _
              $region38: #{conv_pool_block.2} parent=35 // loop_header
                %s166 = sphi 0, %s170
                %p167 = scmp.ge.s32.totalorder %s166, 1
                %s171 = sphi %s156, %s156
                %s172 = sphi %s150, %s150
              $region39: #{conv_pool_block.2} parent=35 // loop_header_branch
                %169 = sbr.rel (%p167) target = $region43
              $region40: #{conv_pool_block.2} parent=35 // loop_body
                %v173 = vld [vmem:[%s171] sm:%s164]
                %174 = vst [vmem:[%s172] sm:%s164] %v173
                %v175 = vld [vmem:[%s171 + $0x10] sm:%s164]
                %176 = vst [vmem:[%s172 + $0x8] sm:%s164] %v175
                %v177 = vld [vmem:[%s171 + $0x20] sm:%s164]
                %178 = vst [vmem:[%s172 + $0x10] sm:%s164] %v177
                %v179 = vld [vmem:[%s171 + $0x30] sm:%s164]
                %180 = vst [vmem:[%s172 + $0x18] sm:%s164] %v179
                %v181 = vld [vmem:[%s171 + $0x40] sm:%s164]
                %182 = vst [vmem:[%s172 + $0x20] sm:%s164] %v181
                %v183 = vld [vmem:[%s171 + $0x50] sm:%s164]
                %184 = vst [vmem:[%s172 + $0x28] sm:%s164] %v183
                %v185 = vld [vmem:[%s171 + $0x60] sm:%s164]
                %186 = vst [vmem:[%s172 + $0x30] sm:%s164] %v185
                %v187 = vld [vmem:[%s171 + $0x70] sm:%s164]
                %188 = vst [vmem:[%s172 + $0x38] sm:%s164] %v187
                %v189 = vld [vmem:[%s171 + $0x80] sm:%s164]
                %190 = vst [vmem:[%s172 + $0x40] sm:%s164] %v189
                %v191 = vld [vmem:[%s171 + $0x90] sm:%s164]
                %192 = vst [vmem:[%s172 + $0x48] sm:%s164] %v191
                %v193 = vld [vmem:[%s171 + $0xa0] sm:%s164]
                %194 = vst [vmem:[%s172 + $0x50] sm:%s164] %v193
                %v195 = vld [vmem:[%s171 + $0xb0] sm:%s164]
                %196 = vst [vmem:[%s172 + $0x58] sm:%s164] %v195
                %v197 = vld [vmem:[%s171 + $0xc0] sm:%s164]
                %198 = vst [vmem:[%s172 + $0x60] sm:%s164] %v197
                %v199 = vld [vmem:[%s171 + $0xd0] sm:%s164]
                %200 = vst [vmem:[%s172 + $0x68] sm:%s164] %v199
                %v201 = vld [vmem:[%s171 + $0xe0] sm:%s164]
                %202 = vst [vmem:[%s172 + $0x70] sm:%s164] %v201
                %v203 = vld [vmem:[%s171 + $0xf0] sm:%s164]
                %204 = vst [vmem:[%s172 + $0x78] sm:%s164] %v203
                %v205 = vld [vmem:[%s171 + $0x100] sm:%s164]
                %206 = vst [vmem:[%s172 + $0x80] sm:%s164] %v205
                %v207 = vld [vmem:[%s171 + $0x110] sm:%s164]
                %208 = vst [vmem:[%s172 + $0x88] sm:%s164] %v207
                %v209 = vld [vmem:[%s171 + $0x120] sm:%s164]
                %210 = vst [vmem:[%s172 + $0x90] sm:%s164] %v209
                %v211 = vld [vmem:[%s171 + $0x130] sm:%s164]
                %212 = vst [vmem:[%s172 + $0x98] sm:%s164] %v211
                %v213 = vld [vmem:[%s171 + $0x140] sm:%s164]
                %214 = vst [vmem:[%s172 + $0xa0] sm:%s164] %v213
                %v215 = vld [vmem:[%s171 + $0x150] sm:%s164]
                %216 = vst [vmem:[%s172 + $0xa8] sm:%s164] %v215
                %v217 = vld [vmem:[%s171 + $0x160] sm:%s164]
                %218 = vst [vmem:[%s172 + $0xb0] sm:%s164] %v217
                %v219 = vld [vmem:[%s171 + $0x170] sm:%s164]
                %220 = vst [vmem:[%s172 + $0xb8] sm:%s164] %v219
                %v221 = vld [vmem:[%s171 + $0x180] sm:%s164]
                %222 = vst [vmem:[%s172 + $0xc0] sm:%s164] %v221
                %v223 = vld [vmem:[%s171 + $0x190] sm:%s164]
                %224 = vst [vmem:[%s172 + $0xc8] sm:%s164] %v223
                %v225 = vld [vmem:[%s171 + $0x1a0] sm:%s164]
                %226 = vst [vmem:[%s172 + $0xd0] sm:%s164] %v225
                %v227 = vld [vmem:[%s171 + $0x1b0] sm:%s164]
                %228 = vst [vmem:[%s172 + $0xd8] sm:%s164] %v227
                %v229 = vld [vmem:[%s171 + $0x1c0] sm:%s164]
                %230 = vst [vmem:[%s172 + $0xe0] sm:%s164] %v229
                %v231 = vld [vmem:[%s171 + $0x1d0] sm:%s164]
                %232 = vst [vmem:[%s172 + $0xe8] sm:%s164] %v231
                %v233 = vld [vmem:[%s171 + $0x1e0] sm:%s164]
                %234 = vst [vmem:[%s172 + $0xf0] sm:%s164] %v233
                %v235 = vld [vmem:[%s171 + $0x1f0] sm:%s164]
                %236 = vst [vmem:[%s172 + $0xf8] sm:%s164] %v235
              $region41: #{conv_pool_block.2} parent=35 // loop_footer
                %s170 = sadd.s32 1, %s166
              $region42: #{conv_pool_block.2} parent=35 // loop_footer_branch
                %165 = sbr.rel target = $region38
              $region43: #{conv_pool_block.2} parent=35 // loop_exit
                _
            $region36: #{conv_pool_block.2} parent=27 // pred_fallthru
              _
          $region28: #{conv_pool_block.2} parent=23 // pred_fallthru
            _
          %313 = vnop
        $region24: #{conv_pool_block.2} parent=19 // pred_fallthru
          _
        // Predicated region
        $region59: #{conv_pool_block.2} parent=19 // pred_check
          %p314 = pneg %p69
        $region60: #{conv_pool_block.2} parent=19 // pred_check_branch
          %316 = sbr.rel (%p314) target = $region62
        $region61: #{conv_pool_block.2} parent=19 // pred_region
          %s317 = smul.u32 32, %s17
          %p318 = scmp.lt.s32.totalorder %s317, 63
          %s319 = scalar_select %p318, %s317, 63
          %s320 = smul.addr %s319, 4
          %s321 = scalar_lea.vmem %s1, %s320
          %s322 = smul.u32 32, %s17
        $region62: #{conv_pool_block.2} parent=19 // pred_fallthru
          _
      $region20: #{conv_pool_block.2} parent=5 // pred_fallthru
        _
      %p323 = scmp.le.s32.totalorder 1, %s9
      %p324 = scmp.lt.s32.totalorder %s9, 5
      %p325 = pnand %p323, %p324
      %p326 = pneg %p325
      // Predicated region
      $region63: #{conv_pool_block.2} parent=5 // pred_check
        _
      $region64: #{conv_pool_block.2} parent=5 // pred_check_branch
        %328 = sbr.rel (%p325) target = $region66
      $region65: #{conv_pool_block.2} parent=5 // pred_region
        %s329 = ssub.s32 %s9, 1
        %s330 = sand.u32 %s36, 1
        %s331 = sand.u32 %s36, 1
        %s332 = smul.addr %s331, 256
        %s333 = scalar_lea.vmem [#allocation3], %s332
        // Predicated region
        $region67: #{conv_pool_block.2} parent=65 // pred_check
          %p334 = pneg %p49
        $region68: #{conv_pool_block.2} parent=65 // pred_check_branch
          %336 = sbr.rel (%p334) target = $region70
        $region69: #{conv_pool_block.2} parent=65 // pred_region
          _
        $region70: #{conv_pool_block.2} parent=65 // pred_fallthru
          _
        %s337 = sand.u32 %s36, 1
        %s338 = sand.u32 %s36, 1
        %s339 = smul.addr %s338, 256
        %s340 = scalar_lea.vmem [#allocation3], %s339
        %p341 = pneg %p49
        %p342 = pneg %p46
        %s343 = smul.u32 32, %s19
        %p344 = scmp.lt.s32.totalorder %s343, 63
        %s345 = scalar_select %p344, %s343, 63
        %s346 = smul.addr %s345, 4
        %s347 = scalar_lea.vmem %s1, %s346
        %p348 = pneg %p75
        %p349 = pneg %p72
        %p350 = pneg %p96
        %p351 = pneg %p93
        %p352 = pneg %p122
        %p353 = pneg %p119
        %s354 = smul.u32 32, %s18
        %p355 = scmp.lt.s32.totalorder %s354, 63
        %s356 = scalar_select %p355, %s354, 63
        %s357 = smul.addr %s356, 8
        %s358 = scalar_lea.vmem %s3, %s357
        %s359 = smul.u32 32, %s18
        %s360 = smul.u32 2, %s19
        %s361 = smul.u32 32, %s19
        %p362 = scmp.lt.s32.totalorder %s361, 63
        %s363 = scalar_select %p362, %s361, 63
        %s364 = smul.addr %s363, 4
        %s365 = scalar_lea.vmem %s1, %s364
        %s366 = smul.u32 32, %s19
        %s367 = smul.u32 32, %s18
        %p368 = scmp.lt.s32.totalorder %s367, 63
        %s369 = scalar_select %p368, %s367, 63
        %s370 = smul.addr %s369, 8
        %s371 = scalar_lea.vmem %s3, %s370
        %s372 = smul.u32 32, %s18
        %p373 = scmp.eq.s32.totalorder %s19, 0
        // Predicated region
        $region71: #{conv_pool_block.2} parent=65 // pred_check
          %p374 = pneg %p373
        $region72: #{conv_pool_block.2} parent=65 // pred_check_branch
          %376 = sbr.rel (%p374) target = $region74
        $region73: #{conv_pool_block.2} parent=65 // pred_region
          %377 = vst [vmem:[#allocation2] sm:$0xff] 0.0
          %378 = vst [vmem:[#allocation2 + $0x8] sm:$0xff] 0.0
          %379 = vst [vmem:[#allocation2 + $0x10] sm:$0xff] 0.0
          %380 = vst [vmem:[#allocation2 + $0x18] sm:$0xff] 0.0
          %381 = vst [vmem:[#allocation2 + $0x20] sm:$0xff] 0.0
          %382 = vst [vmem:[#allocation2 + $0x28] sm:$0xff] 0.0
          %383 = vst [vmem:[#allocation2 + $0x30] sm:$0xff] 0.0
          %384 = vst [vmem:[#allocation2 + $0x38] sm:$0xff] 0.0
          %385 = vst [vmem:[#allocation2 + $0x40] sm:$0xff] 0.0
          %386 = vst [vmem:[#allocation2 + $0x48] sm:$0xff] 0.0
          %387 = vst [vmem:[#allocation2 + $0x50] sm:$0xff] 0.0
          %388 = vst [vmem:[#allocation2 + $0x58] sm:$0xff] 0.0
          %389 = vst [vmem:[#allocation2 + $0x60] sm:$0xff] 0.0
          %390 = vst [vmem:[#allocation2 + $0x68] sm:$0xff] 0.0
          %391 = vst [vmem:[#allocation2 + $0x70] sm:$0xff] 0.0
          %392 = vst [vmem:[#allocation2 + $0x78] sm:$0xff] 0.0
          %393 = vst [vmem:[#allocation2 + $0x80] sm:$0xff] 0.0
          %394 = vst [vmem:[#allocation2 + $0x88] sm:$0xff] 0.0
          %395 = vst [vmem:[#allocation2 + $0x90] sm:$0xff] 0.0
          %396 = vst [vmem:[#allocation2 + $0x98] sm:$0xff] 0.0
          %397 = vst [vmem:[#allocation2 + $0xa0] sm:$0xff] 0.0
          %398 = vst [vmem:[#allocation2 + $0xa8] sm:$0xff] 0.0
          %399 = vst [vmem:[#allocation2 + $0xb0] sm:$0xff] 0.0
          %400 = vst [vmem:[#allocation2 + $0xb8] sm:$0xff] 0.0
          %401 = vst [vmem:[#allocation2 + $0xc0] sm:$0xff] 0.0
          %402 = vst [vmem:[#allocation2 + $0xc8] sm:$0xff] 0.0
          %403 = vst [vmem:[#allocation2 + $0xd0] sm:$0xff] 0.0
          %404 = vst [vmem:[#allocation2 + $0xd8] sm:$0xff] 0.0
          %405 = vst [vmem:[#allocation2 + $0xe0] sm:$0xff] 0.0
          %406 = vst [vmem:[#allocation2 + $0xe8] sm:$0xff] 0.0
          %407 = vst [vmem:[#allocation2 + $0xf0] sm:$0xff] 0.0
          %408 = vst [vmem:[#allocation2 + $0xf8] sm:$0xff] 0.0
        $region74: #{conv_pool_block.2} parent=65 // pred_fallthru
          _
        %v409 = vld [vmem:[#allocation2] sm:$0xff]
        %v410 = vld [vmem:[#allocation2 + $0x8] sm:$0xff]
        %v411 = vld [vmem:[#allocation2 + $0x10] sm:$0xff]
        %v412 = vld [vmem:[#allocation2 + $0x18] sm:$0xff]
        %v413 = vld [vmem:[#allocation2 + $0x20] sm:$0xff]
        %v414 = vld [vmem:[#allocation2 + $0x28] sm:$0xff]
        %v415 = vld [vmem:[#allocation2 + $0x30] sm:$0xff]
        %v416 = vld [vmem:[#allocation2 + $0x38] sm:$0xff]
        %v417 = vld [vmem:[#allocation2 + $0x40] sm:$0xff]
        %v418 = vld [vmem:[#allocation2 + $0x48] sm:$0xff]
        %v419 = vld [vmem:[#allocation2 + $0x50] sm:$0xff]
        %v420 = vld [vmem:[#allocation2 + $0x58] sm:$0xff]
        %v421 = vld [vmem:[#allocation2 + $0x60] sm:$0xff]
        %v422 = vld [vmem:[#allocation2 + $0x68] sm:$0xff]
        %v423 = vld [vmem:[#allocation2 + $0x70] sm:$0xff]
        %v424 = vld [vmem:[#allocation2 + $0x78] sm:$0xff]
        %v425 = vld [vmem:[#allocation2 + $0x80] sm:$0xff]
        %v426 = vld [vmem:[#allocation2 + $0x88] sm:$0xff]
        %v427 = vld [vmem:[#allocation2 + $0x90] sm:$0xff]
        %v428 = vld [vmem:[#allocation2 + $0x98] sm:$0xff]
        %v429 = vld [vmem:[#allocation2 + $0xa0] sm:$0xff]
        %v430 = vld [vmem:[#allocation2 + $0xa8] sm:$0xff]
        %v431 = vld [vmem:[#allocation2 + $0xb0] sm:$0xff]
        %v432 = vld [vmem:[#allocation2 + $0xb8] sm:$0xff]
        %v433 = vld [vmem:[#allocation2 + $0xc0] sm:$0xff]
        %v434 = vld [vmem:[#allocation2 + $0xc8] sm:$0xff]
        %v435 = vld [vmem:[#allocation2 + $0xd0] sm:$0xff]
        %v436 = vld [vmem:[#allocation2 + $0xd8] sm:$0xff]
        %v437 = vld [vmem:[#allocation2 + $0xe0] sm:$0xff]
        %v438 = vld [vmem:[#allocation2 + $0xe8] sm:$0xff]
        %v439 = vld [vmem:[#allocation2 + $0xf0] sm:$0xff]
        %v440 = vld [vmem:[#allocation2 + $0xf8] sm:$0xff]
        %v441 = vld [vmem:[%s333] sm:$0xff]
        %v442 = vld [vmem:[%s333 + $0x8] sm:$0xff]
        %v443 = vld [vmem:[%s333 + $0x10] sm:$0xff]
        %v444 = vld [vmem:[%s333 + $0x18] sm:$0xff]
        %v445 = vld [vmem:[%s333 + $0x20] sm:$0xff]
        %v446 = vld [vmem:[%s333 + $0x28] sm:$0xff]
        %v447 = vld [vmem:[%s333 + $0x30] sm:$0xff]
        %v448 = vld [vmem:[%s333 + $0x38] sm:$0xff]
        %v449 = vld [vmem:[%s333 + $0x40] sm:$0xff]
        %v450 = vld [vmem:[%s333 + $0x48] sm:$0xff]
        %v451 = vld [vmem:[%s333 + $0x50] sm:$0xff]
        %v452 = vld [vmem:[%s333 + $0x58] sm:$0xff]
        %v453 = vld [vmem:[%s333 + $0x60] sm:$0xff]
        %v454 = vld [vmem:[%s333 + $0x68] sm:$0xff]
        %v455 = vld [vmem:[%s333 + $0x70] sm:$0xff]
        %v456 = vld [vmem:[%s333 + $0x78] sm:$0xff]
        %v457 = vld [vmem:[%s333 + $0x80] sm:$0xff]
        %v458 = vld [vmem:[%s333 + $0x88] sm:$0xff]
        %v459 = vld [vmem:[%s333 + $0x90] sm:$0xff]
        %v460 = vld [vmem:[%s333 + $0x98] sm:$0xff]
        %v461 = vld [vmem:[%s333 + $0xa0] sm:$0xff]
        %v462 = vld [vmem:[%s333 + $0xa8] sm:$0xff]
        %v463 = vld [vmem:[%s333 + $0xb0] sm:$0xff]
        %v464 = vld [vmem:[%s333 + $0xb8] sm:$0xff]
        %v465 = vld [vmem:[%s333 + $0xc0] sm:$0xff]
        %v466 = vld [vmem:[%s333 + $0xc8] sm:$0xff]
        %v467 = vld [vmem:[%s333 + $0xd0] sm:$0xff]
        %v468 = vld [vmem:[%s333 + $0xd8] sm:$0xff]
        %v469 = vld [vmem:[%s333 + $0xe0] sm:$0xff]
        %v470 = vld [vmem:[%s333 + $0xe8] sm:$0xff]
        %v471 = vld [vmem:[%s333 + $0xf0] sm:$0xff]
        %v472 = vld [vmem:[%s333 + $0xf8] sm:$0xff]
        %v473 = vld [vmem:[%s365] sm:$0xf]
        %v474 = vld [vmem:[%s365 + $0x4] sm:$0xf]
        %v475 = vld [vmem:[%s365 + $0x8] sm:$0xf]
        %v476 = vld [vmem:[%s365 + $0xc] sm:$0xf]
        %v477 = vld [vmem:[%s365 + $0x10] sm:$0xf]
        %v478 = vld [vmem:[%s365 + $0x14] sm:$0xf]
        %v479 = vld [vmem:[%s365 + $0x18] sm:$0xf]
        %v480 = vld [vmem:[%s365 + $0x1c] sm:$0xf]
        %v481 = vld [vmem:[%s365 + $0x20] sm:$0xf]
        %v482 = vld [vmem:[%s365 + $0x24] sm:$0xf]
        %v483 = vld [vmem:[%s365 + $0x28] sm:$0xf]
        %v484 = vld [vmem:[%s365 + $0x2c] sm:$0xf]
        %v485 = vld [vmem:[%s365 + $0x30] sm:$0xf]
        %v486 = vld [vmem:[%s365 + $0x34] sm:$0xf]
        %v487 = vld [vmem:[%s365 + $0x38] sm:$0xf]
        %v488 = vld [vmem:[%s365 + $0x3c] sm:$0xf]
        %v489 = vld [vmem:[%s365 + $0x40] sm:$0xf]
        %v490 = vld [vmem:[%s365 + $0x44] sm:$0xf]
        %v491 = vld [vmem:[%s365 + $0x48] sm:$0xf]
        %v492 = vld [vmem:[%s365 + $0x4c] sm:$0xf]
        %v493 = vld [vmem:[%s365 + $0x50] sm:$0xf]
        %v494 = vld [vmem:[%s365 + $0x54] sm:$0xf]
        %v495 = vld [vmem:[%s365 + $0x58] sm:$0xf]
        %v496 = vld [vmem:[%s365 + $0x5c] sm:$0xf]
        %v497 = vld [vmem:[%s365 + $0x60] sm:$0xf]
        %v498 = vld [vmem:[%s365 + $0x64] sm:$0xf]
        %v499 = vld [vmem:[%s365 + $0x68] sm:$0xf]
        %v500 = vld [vmem:[%s365 + $0x6c] sm:$0xf]
        %v501 = vld [vmem:[%s365 + $0x70] sm:$0xf]
        %v502 = vld [vmem:[%s365 + $0x74] sm:$0xf]
        %v503 = vld [vmem:[%s365 + $0x78] sm:$0xf]
        %v504 = vld [vmem:[%s365 + $0x7c] sm:$0xf]
        %v537 = vunpack.c.l.b16 %v441
        %v538 = vunpack.c.h.b16 %v441
        %v539 = vunpack.c.l.b16 %v442
        %v540 = vunpack.c.h.b16 %v442
        %v541 = vunpack.c.l.b16 %v443
        %v542 = vunpack.c.h.b16 %v443
        %v543 = vunpack.c.l.b16 %v444
        %v544 = vunpack.c.h.b16 %v444
        %v545 = vunpack.c.l.b16 %v445
        %v546 = vunpack.c.h.b16 %v445
        %v547 = vunpack.c.l.b16 %v446
        %v548 = vunpack.c.h.b16 %v446
        %v549 = vunpack.c.l.b16 %v447
        %v550 = vunpack.c.h.b16 %v447
        %v551 = vunpack.c.l.b16 %v448
        %v552 = vunpack.c.h.b16 %v448
        %v553 = vunpack.c.l.b16 %v449
        %v554 = vunpack.c.h.b16 %v449
        %v555 = vunpack.c.l.b16 %v450
        %v556 = vunpack.c.h.b16 %v450
        %v557 = vunpack.c.l.b16 %v451
        %v558 = vunpack.c.h.b16 %v451
        %v559 = vunpack.c.l.b16 %v452
        %v560 = vunpack.c.h.b16 %v452
        %v561 = vunpack.c.l.b16 %v453
        %v562 = vunpack.c.h.b16 %v453
        %v563 = vunpack.c.l.b16 %v454
        %v564 = vunpack.c.h.b16 %v454
        %v565 = vunpack.c.l.b16 %v455
        %v566 = vunpack.c.h.b16 %v455
        %v567 = vunpack.c.l.b16 %v456
        %v568 = vunpack.c.h.b16 %v456
        %v569 = vunpack.c.l.b16 %v457
        %v570 = vunpack.c.h.b16 %v457
        %v571 = vunpack.c.l.b16 %v458
        %v572 = vunpack.c.h.b16 %v458
        %v573 = vunpack.c.l.b16 %v459
        %v574 = vunpack.c.h.b16 %v459
        %v575 = vunpack.c.l.b16 %v460
        %v576 = vunpack.c.h.b16 %v460
        %v577 = vunpack.c.l.b16 %v461
        %v578 = vunpack.c.h.b16 %v461
        %v579 = vunpack.c.l.b16 %v462
        %v580 = vunpack.c.h.b16 %v462
        %v581 = vunpack.c.l.b16 %v463
        %v582 = vunpack.c.h.b16 %v463
        %v583 = vunpack.c.l.b16 %v464
        %v584 = vunpack.c.h.b16 %v464
        %v585 = vunpack.c.l.b16 %v465
        %v586 = vunpack.c.h.b16 %v465
        %v587 = vunpack.c.l.b16 %v466
        %v588 = vunpack.c.h.b16 %v466
        %v589 = vunpack.c.l.b16 %v467
        %v590 = vunpack.c.h.b16 %v467
        %v591 = vunpack.c.l.b16 %v468
        %v592 = vunpack.c.h.b16 %v468
        %v593 = vunpack.c.l.b16 %v469
        %v594 = vunpack.c.h.b16 %v469
        %v595 = vunpack.c.l.b16 %v470
        %v596 = vunpack.c.h.b16 %v470
        %v597 = vunpack.c.l.b16 %v471
        %v598 = vunpack.c.h.b16 %v471
        %v599 = vunpack.c.l.b16 %v472
        %v600 = vunpack.c.h.b16 %v472
        %v601 = vpack.c.b16 %v539, %v537
        %v602 = vpack.c.b16 %v540, %v538
        %v603 = vpack.c.b16 %v543, %v541
        %v604 = vpack.c.b16 %v544, %v542
        %v605 = vpack.c.b16 %v547, %v545
        %v606 = vpack.c.b16 %v548, %v546
        %v607 = vpack.c.b16 %v551, %v549
        %v608 = vpack.c.b16 %v552, %v550
        %v609 = vpack.c.b16 %v555, %v553
        %v610 = vpack.c.b16 %v556, %v554
        %v611 = vpack.c.b16 %v559, %v557
        %v612 = vpack.c.b16 %v560, %v558
        %v613 = vpack.c.b16 %v563, %v561
        %v614 = vpack.c.b16 %v564, %v562
        %v615 = vpack.c.b16 %v567, %v565
        %v616 = vpack.c.b16 %v568, %v566
        %v617 = vpack.c.b16 %v571, %v569
        %v618 = vpack.c.b16 %v572, %v570
        %v619 = vpack.c.b16 %v575, %v573
        %v620 = vpack.c.b16 %v576, %v574
        %v621 = vpack.c.b16 %v579, %v577
        %v622 = vpack.c.b16 %v580, %v578
        %v623 = vpack.c.b16 %v583, %v581
        %v624 = vpack.c.b16 %v584, %v582
        %v625 = vpack.c.b16 %v587, %v585
        %v626 = vpack.c.b16 %v588, %v586
        %v627 = vpack.c.b16 %v591, %v589
        %v628 = vpack.c.b16 %v592, %v590
        %v629 = vpack.c.b16 %v595, %v593
        %v630 = vpack.c.b16 %v596, %v594
        %v631 = vpack.c.b16 %v599, %v597
        %v632 = vpack.c.b16 %v600, %v598
        %v697 = vunpack.c.l.b16 %v473
        %v698 = vunpack.c.l.b16 %v474
        %v699 = vunpack.c.l.b16 %v475
        %v700 = vunpack.c.l.b16 %v476
        %v701 = vunpack.c.l.b16 %v477
        %v702 = vunpack.c.l.b16 %v478
        %v703 = vunpack.c.l.b16 %v479
        %v704 = vunpack.c.l.b16 %v480
        %v705 = vunpack.c.l.b16 %v481
        %v706 = vunpack.c.l.b16 %v482
        %v707 = vunpack.c.l.b16 %v483
        %v708 = vunpack.c.l.b16 %v484
        %v709 = vunpack.c.l.b16 %v485
        %v710 = vunpack.c.l.b16 %v486
        %v711 = vunpack.c.l.b16 %v487
        %v712 = vunpack.c.l.b16 %v488
        %v713 = vunpack.c.l.b16 %v489
        %v714 = vunpack.c.l.b16 %v490
        %v715 = vunpack.c.l.b16 %v491
        %v716 = vunpack.c.l.b16 %v492
        %v717 = vunpack.c.l.b16 %v493
        %v718 = vunpack.c.l.b16 %v494
        %v719 = vunpack.c.l.b16 %v495
        %v720 = vunpack.c.l.b16 %v496
        %v721 = vunpack.c.l.b16 %v497
        %v722 = vunpack.c.l.b16 %v498
        %v723 = vunpack.c.l.b16 %v499
        %v724 = vunpack.c.l.b16 %v500
        %v725 = vunpack.c.l.b16 %v501
        %v726 = vunpack.c.l.b16 %v502
        %v727 = vunpack.c.l.b16 %v503
        %v728 = vunpack.c.l.b16 %v504
        %v729 = vpack.c.b16 %v698, %v697
        %v730 = vpack.c.b16 %v700, %v699
        %v731 = vpack.c.b16 %v702, %v701
        %v732 = vpack.c.b16 %v704, %v703
        %v733 = vpack.c.b16 %v706, %v705
        %v734 = vpack.c.b16 %v708, %v707
        %v735 = vpack.c.b16 %v710, %v709
        %v736 = vpack.c.b16 %v712, %v711
        %v737 = vpack.c.b16 %v714, %v713
        %v738 = vpack.c.b16 %v716, %v715
        %v739 = vpack.c.b16 %v718, %v717
        %v740 = vpack.c.b16 %v720, %v719
        %v741 = vpack.c.b16 %v722, %v721
        %v742 = vpack.c.b16 %v724, %v723
        %v743 = vpack.c.b16 %v726, %v725
        %v744 = vpack.c.b16 %v728, %v727
        %761 = vmatpush.bf16.msra.mxu0 %v736
        %762 = vmatpush.bf16.msra.mxu0 %v735
        %763 = vmatpush.bf16.msra.mxu0 %v734
        %764 = vmatpush.bf16.msra.mxu0 %v733
        %765 = vmatpush.bf16.msra.mxu0 %v732
        %766 = vmatpush.bf16.msra.mxu0 %v731
        %767 = vmatpush.bf16.msra.mxu0 %v730
        %768 = vmatpush.bf16.msra.mxu0 %v729
        %769 = vmatmul.bf16.gmra.mxu0 %v601
        %v770 = vpop.f32.mrf.mxu0
        %v771 = vadd.f32 0.0, %v770
        %v772 = vpop.f32.mrf.mxu0
        %v773 = vadd.f32 0.0, %v772
        %774 = vmatmul.bf16.gmra.mxu0 %v603
        %v775 = vpop.f32.mrf.mxu0
        %v776 = vadd.f32 0.0, %v775
        %v777 = vpop.f32.mrf.mxu0
        %v778 = vadd.f32 0.0, %v777
        %779 = vmatmul.bf16.gmra.mxu0 %v605
        %v780 = vpop.f32.mrf.mxu0
        %v781 = vadd.f32 0.0, %v780
        %v782 = vpop.f32.mrf.mxu0
        %v783 = vadd.f32 0.0, %v782
        %784 = vmatmul.bf16.gmra.mxu0 %v607
        %v785 = vpop.f32.mrf.mxu0
        %v786 = vadd.f32 0.0, %v785
        %v787 = vpop.f32.mrf.mxu0
        %v788 = vadd.f32 0.0, %v787
        %789 = vmatmul.bf16.gmra.mxu0 %v609
        %v790 = vpop.f32.mrf.mxu0
        %v791 = vadd.f32 0.0, %v790
        %v792 = vpop.f32.mrf.mxu0
        %v793 = vadd.f32 0.0, %v792
        %794 = vmatmul.bf16.gmra.mxu0 %v611
        %v795 = vpop.f32.mrf.mxu0
        %v796 = vadd.f32 0.0, %v795
        %v797 = vpop.f32.mrf.mxu0
        %v798 = vadd.f32 0.0, %v797
        %799 = vmatmul.bf16.gmra.mxu0 %v613
        %v800 = vpop.f32.mrf.mxu0
        %v801 = vadd.f32 0.0, %v800
        %v802 = vpop.f32.mrf.mxu0
        %v803 = vadd.f32 0.0, %v802
        %804 = vmatmul.bf16.gmra.mxu0 %v615
        %v805 = vpop.f32.mrf.mxu0
        %v806 = vadd.f32 0.0, %v805
        %v807 = vpop.f32.mrf.mxu0
        %v808 = vadd.f32 0.0, %v807
        %809 = vmatmul.bf16.gmra.mxu0 %v617
        %v810 = vpop.f32.mrf.mxu0
        %v811 = vadd.f32 0.0, %v810
        %v812 = vpop.f32.mrf.mxu0
        %v813 = vadd.f32 0.0, %v812
        %814 = vmatmul.bf16.gmra.mxu0 %v619
        %v815 = vpop.f32.mrf.mxu0
        %v816 = vadd.f32 0.0, %v815
        %v817 = vpop.f32.mrf.mxu0
        %v818 = vadd.f32 0.0, %v817
        %819 = vmatmul.bf16.gmra.mxu0 %v621
        %v820 = vpop.f32.mrf.mxu0
        %v821 = vadd.f32 0.0, %v820
        %v822 = vpop.f32.mrf.mxu0
        %v823 = vadd.f32 0.0, %v822
        %824 = vmatmul.bf16.gmra.mxu0 %v623
        %v825 = vpop.f32.mrf.mxu0
        %v826 = vadd.f32 0.0, %v825
        %v827 = vpop.f32.mrf.mxu0
        %v828 = vadd.f32 0.0, %v827
        %829 = vmatmul.bf16.gmra.mxu0 %v625
        %v830 = vpop.f32.mrf.mxu0
        %v831 = vadd.f32 0.0, %v830
        %v832 = vpop.f32.mrf.mxu0
        %v833 = vadd.f32 0.0, %v832
        %834 = vmatmul.bf16.gmra.mxu0 %v627
        %v835 = vpop.f32.mrf.mxu0
        %v836 = vadd.f32 0.0, %v835
        %v837 = vpop.f32.mrf.mxu0
        %v838 = vadd.f32 0.0, %v837
        %839 = vmatmul.bf16.gmra.mxu0 %v629
        %v840 = vpop.f32.mrf.mxu0
        %v841 = vadd.f32 0.0, %v840
        %v842 = vpop.f32.mrf.mxu0
        %v843 = vadd.f32 0.0, %v842
        %844 = vmatmul.bf16.gmra.mxu0 %v631
        %v845 = vpop.f32.mrf.mxu0
        %v846 = vadd.f32 0.0, %v845
        %v847 = vpop.f32.mrf.mxu0
        %v848 = vadd.f32 0.0, %v847
        %849 = vdwg.mxu0
        %850 = vmatpush.bf16.msra.mxu0 %v744
        %851 = vmatpush.bf16.msra.mxu0 %v743
        %852 = vmatpush.bf16.msra.mxu0 %v742
        %853 = vmatpush.bf16.msra.mxu0 %v741
        %854 = vmatpush.bf16.msra.mxu0 %v740
        %855 = vmatpush.bf16.msra.mxu0 %v739
        %856 = vmatpush.bf16.msra.mxu0 %v738
        %857 = vmatpush.bf16.msra.mxu0 %v737
        %858 = vmatmul.bf16.gmra.mxu0 %v602
        %v859 = vpop.f32.mrf.mxu0
        %v860 = vadd.f32 %v771, %v859
        %v861 = vpop.f32.mrf.mxu0
        %v862 = vadd.f32 %v773, %v861
        %863 = vmatmul.bf16.gmra.mxu0 %v604
        %v864 = vpop.f32.mrf.mxu0
        %v865 = vadd.f32 %v776, %v864
        %v866 = vpop.f32.mrf.mxu0
        %v867 = vadd.f32 %v778, %v866
        %868 = vmatmul.bf16.gmra.mxu0 %v606
        %v869 = vpop.f32.mrf.mxu0
        %v870 = vadd.f32 %v781, %v869
        %v871 = vpop.f32.mrf.mxu0
        %v872 = vadd.f32 %v783, %v871
        %873 = vmatmul.bf16.gmra.mxu0 %v608
        %v874 = vpop.f32.mrf.mxu0
        %v875 = vadd.f32 %v786, %v874
        %v876 = vpop.f32.mrf.mxu0
        %v877 = vadd.f32 %v788, %v876
        %878 = vmatmul.bf16.gmra.mxu0 %v610
        %v879 = vpop.f32.mrf.mxu0
        %v880 = vadd.f32 %v791, %v879
        %v881 = vpop.f32.mrf.mxu0
        %v882 = vadd.f32 %v793, %v881
        %883 = vmatmul.bf16.gmra.mxu0 %v612
        %v884 = vpop.f32.mrf.mxu0
        %v885 = vadd.f32 %v796, %v884
        %v886 = vpop.f32.mrf.mxu0
        %v887 = vadd.f32 %v798, %v886
        %888 = vmatmul.bf16.gmra.mxu0 %v614
        %v889 = vpop.f32.mrf.mxu0
        %v890 = vadd.f32 %v801, %v889
        %v891 = vpop.f32.mrf.mxu0
        %v892 = vadd.f32 %v803, %v891
        %893 = vmatmul.bf16.gmra.mxu0 %v616
        %v894 = vpop.f32.mrf.mxu0
        %v895 = vadd.f32 %v806, %v894
        %v896 = vpop.f32.mrf.mxu0
        %v897 = vadd.f32 %v808, %v896
        %898 = vmatmul.bf16.gmra.mxu0 %v618
        %v899 = vpop.f32.mrf.mxu0
        %v900 = vadd.f32 %v811, %v899
        %v901 = vpop.f32.mrf.mxu0
        %v902 = vadd.f32 %v813, %v901
        %903 = vmatmul.bf16.gmra.mxu0 %v620
        %v904 = vpop.f32.mrf.mxu0
        %v905 = vadd.f32 %v816, %v904
        %v906 = vpop.f32.mrf.mxu0
        %v907 = vadd.f32 %v818, %v906
        %908 = vmatmul.bf16.gmra.mxu0 %v622
        %v909 = vpop.f32.mrf.mxu0
        %v910 = vadd.f32 %v821, %v909
        %v911 = vpop.f32.mrf.mxu0
        %v912 = vadd.f32 %v823, %v911
        %913 = vmatmul.bf16.gmra.mxu0 %v624
        %v914 = vpop.f32.mrf.mxu0
        %v915 = vadd.f32 %v826, %v914
        %v916 = vpop.f32.mrf.mxu0
        %v917 = vadd.f32 %v828, %v916
        %918 = vmatmul.bf16.gmra.mxu0 %v626
        %v919 = vpop.f32.mrf.mxu0
        %v920 = vadd.f32 %v831, %v919
        %v921 = vpop.f32.mrf.mxu0
        %v922 = vadd.f32 %v833, %v921
        %923 = vmatmul.bf16.gmra.mxu0 %v628
        %v924 = vpop.f32.mrf.mxu0
        %v925 = vadd.f32 %v836, %v924
        %v926 = vpop.f32.mrf.mxu0
        %v927 = vadd.f32 %v838, %v926
        %928 = vmatmul.bf16.gmra.mxu0 %v630
        %v929 = vpop.f32.mrf.mxu0
        %v930 = vadd.f32 %v841, %v929
        %v931 = vpop.f32.mrf.mxu0
        %v932 = vadd.f32 %v843, %v931
        %933 = vmatmul.bf16.gmra.mxu0 %v632
        %v934 = vpop.f32.mrf.mxu0
        %v935 = vadd.f32 %v846, %v934
        %v936 = vpop.f32.mrf.mxu0
        %v937 = vadd.f32 %v848, %v936
        %938 = vdwg.mxu0
        %v939 = vadd.f32 %v409, %v860
        %v940 = vadd.f32 %v410, %v862
        %v941 = vadd.f32 %v411, %v865
        %v942 = vadd.f32 %v412, %v867
        %v943 = vadd.f32 %v413, %v870
        %v944 = vadd.f32 %v414, %v872
        %v945 = vadd.f32 %v415, %v875
        %v946 = vadd.f32 %v416, %v877
        %v947 = vadd.f32 %v417, %v880
        %v948 = vadd.f32 %v418, %v882
        %v949 = vadd.f32 %v419, %v885
        %v950 = vadd.f32 %v420, %v887
        %v951 = vadd.f32 %v421, %v890
        %v952 = vadd.f32 %v422, %v892
        %v953 = vadd.f32 %v423, %v895
        %v954 = vadd.f32 %v424, %v897
        %v955 = vadd.f32 %v425, %v900
        %v956 = vadd.f32 %v426, %v902
        %v957 = vadd.f32 %v427, %v905
        %v958 = vadd.f32 %v428, %v907
        %v959 = vadd.f32 %v429, %v910
        %v960 = vadd.f32 %v430, %v912
        %v961 = vadd.f32 %v431, %v915
        %v962 = vadd.f32 %v432, %v917
        %v963 = vadd.f32 %v433, %v920
        %v964 = vadd.f32 %v434, %v922
        %v965 = vadd.f32 %v435, %v925
        %v966 = vadd.f32 %v436, %v927
        %v967 = vadd.f32 %v437, %v930
        %v968 = vadd.f32 %v438, %v932
        %v969 = vadd.f32 %v439, %v935
        %v970 = vadd.f32 %v440, %v937
        %971 = vst [vmem:[#allocation2] sm:$0xff] %v939
        %972 = vst [vmem:[#allocation2 + $0x8] sm:$0xff] %v940
        %973 = vst [vmem:[#allocation2 + $0x10] sm:$0xff] %v941
        %974 = vst [vmem:[#allocation2 + $0x18] sm:$0xff] %v942
        %975 = vst [vmem:[#allocation2 + $0x20] sm:$0xff] %v943
        %976 = vst [vmem:[#allocation2 + $0x28] sm:$0xff] %v944
        %977 = vst [vmem:[#allocation2 + $0x30] sm:$0xff] %v945
        %978 = vst [vmem:[#allocation2 + $0x38] sm:$0xff] %v946
        %979 = vst [vmem:[#allocation2 + $0x40] sm:$0xff] %v947
        %980 = vst [vmem:[#allocation2 + $0x48] sm:$0xff] %v948
        %981 = vst [vmem:[#allocation2 + $0x50] sm:$0xff] %v949
        %982 = vst [vmem:[#allocation2 + $0x58] sm:$0xff] %v950
        %983 = vst [vmem:[#allocation2 + $0x60] sm:$0xff] %v951
        %984 = vst [vmem:[#allocation2 + $0x68] sm:$0xff] %v952
        %985 = vst [vmem:[#allocation2 + $0x70] sm:$0xff] %v953
        %986 = vst [vmem:[#allocation2 + $0x78] sm:$0xff] %v954
        %987 = vst [vmem:[#allocation2 + $0x80] sm:$0xff] %v955
        %988 = vst [vmem:[#allocation2 + $0x88] sm:$0xff] %v956
        %989 = vst [vmem:[#allocation2 + $0x90] sm:$0xff] %v957
        %990 = vst [vmem:[#allocation2 + $0x98] sm:$0xff] %v958
        %991 = vst [vmem:[#allocation2 + $0xa0] sm:$0xff] %v959
        %992 = vst [vmem:[#allocation2 + $0xa8] sm:$0xff] %v960
        %993 = vst [vmem:[#allocation2 + $0xb0] sm:$0xff] %v961
        %994 = vst [vmem:[#allocation2 + $0xb8] sm:$0xff] %v962
        %995 = vst [vmem:[#allocation2 + $0xc0] sm:$0xff] %v963
        %996 = vst [vmem:[#allocation2 + $0xc8] sm:$0xff] %v964
        %997 = vst [vmem:[#allocation2 + $0xd0] sm:$0xff] %v965
        %998 = vst [vmem:[#allocation2 + $0xd8] sm:$0xff] %v966
        %999 = vst [vmem:[#allocation2 + $0xe0] sm:$0xff] %v967
        %1000 = vst [vmem:[#allocation2 + $0xe8] sm:$0xff] %v968
        %1001 = vst [vmem:[#allocation2 + $0xf0] sm:$0xff] %v969
        %1002 = vst [vmem:[#allocation2 + $0xf8] sm:$0xff] %v970
        %p1003 = scmp.eq.s32.totalorder %s19, 1
        // Predicated region
        $region75: #{conv_pool_block.2} parent=65 // pred_check
          %p1004 = pneg %p1003
        $region76: #{conv_pool_block.2} parent=65 // pred_check_branch
          %1006 = sbr.rel (%p1004) target = $region78
        $region77: #{conv_pool_block.2} parent=65 // pred_region
          %v1007 = vld [vmem:[#allocation2] sm:$0xff]
          %v1008 = vld [vmem:[#allocation2 + $0x8] sm:$0xff]
          %v1009 = vld [vmem:[#allocation2 + $0x10] sm:$0xff]
          %v1010 = vld [vmem:[#allocation2 + $0x18] sm:$0xff]
          %v1011 = vld [vmem:[#allocation2 + $0x20] sm:$0xff]
          %v1012 = vld [vmem:[#allocation2 + $0x28] sm:$0xff]
          %v1013 = vld [vmem:[#allocation2 + $0x30] sm:$0xff]
          %v1014 = vld [vmem:[#allocation2 + $0x38] sm:$0xff]
          %v1015 = vld [vmem:[#allocation2 + $0x40] sm:$0xff]
          %v1016 = vld [vmem:[#allocation2 + $0x48] sm:$0xff]
          %v1017 = vld [vmem:[#allocation2 + $0x50] sm:$0xff]
          %v1018 = vld [vmem:[#allocation2 + $0x58] sm:$0xff]
          %v1019 = vld [vmem:[#allocation2 + $0x60] sm:$0xff]
          %v1020 = vld [vmem:[#allocation2 + $0x68] sm:$0xff]
          %v1021 = vld [vmem:[#allocation2 + $0x70] sm:$0xff]
          %v1022 = vld [vmem:[#allocation2 + $0x78] sm:$0xff]
          %v1023 = vld [vmem:[#allocation2 + $0x80] sm:$0xff]
          %v1024 = vld [vmem:[#allocation2 + $0x88] sm:$0xff]
          %v1025 = vld [vmem:[#allocation2 + $0x90] sm:$0xff]
          %v1026 = vld [vmem:[#allocation2 + $0x98] sm:$0xff]
          %v1027 = vld [vmem:[#allocation2 + $0xa0] sm:$0xff]
          %v1028 = vld [vmem:[#allocation2 + $0xa8] sm:$0xff]
          %v1029 = vld [vmem:[#allocation2 + $0xb0] sm:$0xff]
          %v1030 = vld [vmem:[#allocation2 + $0xb8] sm:$0xff]
          %v1031 = vld [vmem:[#allocation2 + $0xc0] sm:$0xff]
          %v1032 = vld [vmem:[#allocation2 + $0xc8] sm:$0xff]
          %v1033 = vld [vmem:[#allocation2 + $0xd0] sm:$0xff]
          %v1034 = vld [vmem:[#allocation2 + $0xd8] sm:$0xff]
          %v1035 = vld [vmem:[#allocation2 + $0xe0] sm:$0xff]
          %v1036 = vld [vmem:[#allocation2 + $0xe8] sm:$0xff]
          %v1037 = vld [vmem:[#allocation2 + $0xf0] sm:$0xff]
          %v1038 = vld [vmem:[#allocation2 + $0xf8] sm:$0xff]
          %v1039 = vld [vmem:[%s2] sm:$0x1]
          %v1041 = vperm.slane %v1039, 0
          %v1043 = vadd.f32 %v1007, %v1041
          %v1044 = vadd.f32 %v1008, %v1041
          %v1045 = vadd.f32 %v1009, %v1041
          %v1046 = vadd.f32 %v1010, %v1041
          %v1047 = vadd.f32 %v1011, %v1041
          %v1048 = vadd.f32 %v1012, %v1041
          %v1049 = vadd.f32 %v1013, %v1041
          %v1050 = vadd.f32 %v1014, %v1041
          %v1051 = vadd.f32 %v1015, %v1041
          %v1052 = vadd.f32 %v1016, %v1041
          %v1053 = vadd.f32 %v1017, %v1041
          %v1054 = vadd.f32 %v1018, %v1041
          %v1055 = vadd.f32 %v1019, %v1041
          %v1056 = vadd.f32 %v1020, %v1041
          %v1057 = vadd.f32 %v1021, %v1041
          %v1058 = vadd.f32 %v1022, %v1041
          %v1059 = vadd.f32 %v1023, %v1041
          %v1060 = vadd.f32 %v1024, %v1041
          %v1061 = vadd.f32 %v1025, %v1041
          %v1062 = vadd.f32 %v1026, %v1041
          %v1063 = vadd.f32 %v1027, %v1041
          %v1064 = vadd.f32 %v1028, %v1041
          %v1065 = vadd.f32 %v1029, %v1041
          %v1066 = vadd.f32 %v1030, %v1041
          %v1067 = vadd.f32 %v1031, %v1041
          %v1068 = vadd.f32 %v1032, %v1041
          %v1069 = vadd.f32 %v1033, %v1041
          %v1070 = vadd.f32 %v1034, %v1041
          %v1071 = vadd.f32 %v1035, %v1041
          %v1072 = vadd.f32 %v1036, %v1041
          %v1073 = vadd.f32 %v1037, %v1041
          %v1074 = vadd.f32 %v1038, %v1041
          %v1075 = vmax.f32 %v1043, 0.0
          %v1076 = vmax.f32 %v1044, 0.0
          %v1077 = vmax.f32 %v1045, 0.0
          %v1078 = vmax.f32 %v1046, 0.0
          %v1079 = vmax.f32 %v1047, 0.0
          %v1080 = vmax.f32 %v1048, 0.0
          %v1081 = vmax.f32 %v1049, 0.0
          %v1082 = vmax.f32 %v1050, 0.0
          %v1083 = vmax.f32 %v1051, 0.0
          %v1084 = vmax.f32 %v1052, 0.0
          %v1085 = vmax.f32 %v1053, 0.0
          %v1086 = vmax.f32 %v1054, 0.0
          %v1087 = vmax.f32 %v1055, 0.0
          %v1088 = vmax.f32 %v1056, 0.0
          %v1089 = vmax.f32 %v1057, 0.0
          %v1090 = vmax.f32 %v1058, 0.0
          %v1091 = vmax.f32 %v1059, 0.0
          %v1092 = vmax.f32 %v1060, 0.0
          %v1093 = vmax.f32 %v1061, 0.0
          %v1094 = vmax.f32 %v1062, 0.0
          %v1095 = vmax.f32 %v1063, 0.0
          %v1096 = vmax.f32 %v1064, 0.0
          %v1097 = vmax.f32 %v1065, 0.0
          %v1098 = vmax.f32 %v1066, 0.0
          %v1099 = vmax.f32 %v1067, 0.0
          %v1100 = vmax.f32 %v1068, 0.0
          %v1101 = vmax.f32 %v1069, 0.0
          %v1102 = vmax.f32 %v1070, 0.0
          %v1103 = vmax.f32 %v1071, 0.0
          %v1104 = vmax.f32 %v1072, 0.0
          %v1105 = vmax.f32 %v1073, 0.0
          %v1106 = vmax.f32 %v1074, 0.0
          %1107 = vst [vmem:[%s371] sm:$0xff] %v1075
          %1108 = vst [vmem:[%s371 + $0x8] sm:$0xff] %v1076
          %1109 = vst [vmem:[%s371 + $0x10] sm:$0xff] %v1077
          %1110 = vst [vmem:[%s371 + $0x18] sm:$0xff] %v1078
          %1111 = vst [vmem:[%s371 + $0x20] sm:$0xff] %v1079
          %1112 = vst [vmem:[%s371 + $0x28] sm:$0xff] %v1080
          %1113 = vst [vmem:[%s371 + $0x30] sm:$0xff] %v1081
          %1114 = vst [vmem:[%s371 + $0x38] sm:$0xff] %v1082
          %1115 = vst [vmem:[%s371 + $0x40] sm:$0xff] %v1083
          %1116 = vst [vmem:[%s371 + $0x48] sm:$0xff] %v1084
          %1117 = vst [vmem:[%s371 + $0x50] sm:$0xff] %v1085
          %1118 = vst [vmem:[%s371 + $0x58] sm:$0xff] %v1086
          %1119 = vst [vmem:[%s371 + $0x60] sm:$0xff] %v1087
          %1120 = vst [vmem:[%s371 + $0x68] sm:$0xff] %v1088
          %1121 = vst [vmem:[%s371 + $0x70] sm:$0xff] %v1089
          %1122 = vst [vmem:[%s371 + $0x78] sm:$0xff] %v1090
          %1123 = vst [vmem:[%s371 + $0x80] sm:$0xff] %v1091
          %1124 = vst [vmem:[%s371 + $0x88] sm:$0xff] %v1092
          %1125 = vst [vmem:[%s371 + $0x90] sm:$0xff] %v1093
          %1126 = vst [vmem:[%s371 + $0x98] sm:$0xff] %v1094
          %1127 = vst [vmem:[%s371 + $0xa0] sm:$0xff] %v1095
          %1128 = vst [vmem:[%s371 + $0xa8] sm:$0xff] %v1096
          %1129 = vst [vmem:[%s371 + $0xb0] sm:$0xff] %v1097
          %1130 = vst [vmem:[%s371 + $0xb8] sm:$0xff] %v1098
          %1131 = vst [vmem:[%s371 + $0xc0] sm:$0xff] %v1099
          %1132 = vst [vmem:[%s371 + $0xc8] sm:$0xff] %v1100
          %1133 = vst [vmem:[%s371 + $0xd0] sm:$0xff] %v1101
          %1134 = vst [vmem:[%s371 + $0xd8] sm:$0xff] %v1102
          %1135 = vst [vmem:[%s371 + $0xe0] sm:$0xff] %v1103
          %1136 = vst [vmem:[%s371 + $0xe8] sm:$0xff] %v1104
          %1137 = vst [vmem:[%s371 + $0xf0] sm:$0xff] %v1105
          %1138 = vst [vmem:[%s371 + $0xf8] sm:$0xff] %v1106
        $region78: #{conv_pool_block.2} parent=65 // pred_fallthru
          _
        %s1139 = smul.u32 32, %s18
        %p1140 = scmp.lt.s32.totalorder %s1139, 63
        %s1141 = scalar_select %p1140, %s1139, 63
        %s1142 = smul.addr %s1141, 8
        %s1143 = scalar_lea.vmem %s3, %s1142
        // Predicated region
        $region79: #{conv_pool_block.2} parent=65 // pred_check
          %p1144 = pneg %p119
        $region80: #{conv_pool_block.2} parent=65 // pred_check_branch
          %1146 = sbr.rel (%p1144) target = $region82
        $region81: #{conv_pool_block.2} parent=65 // pred_region
          %s1147 = smul.u32 32, %s18
        $region82: #{conv_pool_block.2} parent=65 // pred_fallthru
          _
      $region66: #{conv_pool_block.2} parent=5 // pred_fallthru
        _
      %p1148 = scmp.le.s32.totalorder 2, %s9
      // Predicated region
      $region83: #{conv_pool_block.2} parent=5 // pred_check
        %p1149 = pneg %p1148
      $region84: #{conv_pool_block.2} parent=5 // pred_check_branch
        %1151 = sbr.rel (%p1149) target = $region86
      $region85: #{conv_pool_block.2} parent=5 // pred_region
        %s1152 = ssub.s32 %s9, 2
        // Predicated region
        $region87: #{conv_pool_block.2} parent=85 // pred_check
          %p1153 = pneg %p125
        $region88: #{conv_pool_block.2} parent=85 // pred_check_branch
          %1155 = sbr.rel (%p1153) target = $region90
        $region89: #{conv_pool_block.2} parent=85 // pred_region
          %s1156 = smul.u32 32, %s20
          %p1157 = scmp.lt.s32.totalorder %s1156, 63
          %s1158 = scalar_select %p1157, %s1156, 63
          %s1159 = smul.addr %s1158, 8
          %s1160 = scalar_lea.vmem %s3, %s1159
        $region90: #{conv_pool_block.2} parent=85 // pred_fallthru
          _
      $region86: #{conv_pool_block.2} parent=5 // pred_fallthru
        _
    $region6: #{conv_pool_block.2} parent=1 // loop_footer
      %s13 = sadd.s32 1, %s9
    $region7: #{conv_pool_block.2} parent=1 // loop_footer_branch
      %8 = sbr.rel target = $region3
    $region8: #{conv_pool_block.2} parent=1 // loop_exit
      _

// kernel: conv_pool_block.3
$region0: #{conv_pool_block.3}
  #allocation0 [shape = 'u32[]', space=smem, size = 0x4, offset = 0x4, fixed_abs, tag = 'smem constant byte address 0x4 - core index']
  #allocation1 [shape = 'u32[72,128]{1,0:T(1,128)}', space=vmem, size = 0x9000, scoped, tag = 'internal scratch']
  #allocation2 [shape = 'f32[256,1]{1,0:T(8,128)}', space=vmem, size = 0x20000, scoped, tag = 'scratch operand']
  #allocation3 [shape = 'f32[1,1]{1,0:T(1,128)S(6)}', space=smem, size = 0x200, scoped, tag = 'scoped memory for conv_pool_block.3']
  %s0 = inlined_call_operand.vmem [shape: bf16[512,512], index: 0, kind: input, shape index: {}]
  %s1 = inlined_call_operand.vmem [shape: bf16[512,1], index: 1, kind: input, shape index: {}]
  %s2 = inlined_call_operand.vmem [shape: f32[512,128], index: 2, kind: input, shape index: {}]
  %s3 = inlined_call_operand.<no memory space> [shape: f32[1,1], index: 3, kind: input, shape index: {}]
  %s4 = inlined_call_operand.vmem [shape: f32[512,128], index: 4, kind: output, shape index: {0}]
  %s5 = inlined_call_operand.vmem [shape: f32[512,1], index: 5, kind: output, shape index: {1}]
  %6 = xla_tuple %s4, %s5
  %s7 = sld [smem:[#allocation0]]
  $region103: #{conv_pool_block.3} parent=0
    _
  %s9 = ssub.s32 1, %s7
  %s10 = scalar_select 0, %s9, %s7
  %11 = sst [smem:[#allocation3]] %s3
  $region1: #{conv_pool_block.3} parent=0
    #allocation4 [shape = 'u8[262144]{0}', space=vmem, size = 0x40000, scoped, tag = 'input window, operand 0']
    loop: start=0, step=1, limit=6
    $region2: #{conv_pool_block.3} parent=1 // loop_pre_header
      _
    $region3: #{conv_pool_block.3} parent=1 // loop_header
      %s13 = sphi 0, %s17
      %p14 = scmp.ge.s32.totalorder %s13, 6
      %s20 = sphi 0, %s32
      %s21 = sphi 0, %s28
      %s22 = sphi 0, %s20
      %s23 = sphi 0, %s21
      %s24 = sphi 0, %s22
      %s25 = sphi 0, %s23
      %s37 = sphi 0, %s39
      %s40 = sphi 0, %s37
      %s41 = sphi 0, %s40
      %s57 = sphi 0, %s41
      %s63 = sphi 0, %s65
      %s66 = sphi 0, %s63
      %s67 = sphi 0, %s66
      %s83 = sphi 0, %s67
      %s89 = sphi 0, %s91
      %s92 = sphi 0, %s89
      %s93 = sphi 0, %s92
      %s109 = sphi 0, %s93
      %s113 = sphi 0, %s113
      %s115 = sphi 0, %s113
      %s116 = sphi 0, %s115
      %s130 = sphi 0, %s116
      %s136 = sphi 0, %s138
      %s139 = sphi 0, %s136
      %s140 = sphi 0, %s139
      %s156 = sphi 0, %s140
      %s162 = sphi 0, %s164
      %s165 = sphi 0, %s162
      %s166 = sphi 0, %s165
      %s182 = sphi 0, %s166
    $region4: #{conv_pool_block.3} parent=1 // loop_header_branch
      %16 = sbr.rel (%p14) target = $region8
    $region5: #{conv_pool_block.3} parent=1 // loop_body
      %s18 = ssub.s32 %s13, 1
      %s19 = ssub.s32 %s13, 2
      %s26 = sadd.s32 1, %s21
      %p27 = scmp.ge.s32.totalorder %s26, 2
      %s28 = scalar_select %p27, 0, %s26
      %s29 = sadd.s32 1, %s20
      %s30 = scalar_select %p27, %s29, %s20
      %p31 = scmp.ge.s32.totalorder %s30, 2
      %s32 = scalar_select %p31, 0, %s30
      %s33 = ssub.s32 %s20, %s32
      %s34 = ssub.s32 %s21, %s28
      %s35 = sor.u32 %s33, %s34
      %p36 = scmp.eq.s32.totalorder %s35, 0
      %s38 = sadd.s32 %s37, 1
      %s39 = scalar_select %p36, %s37, %s38
      %p42 = pneg %p36
      %p43 = scmp.eq.s32.totalorder %s13, 3
      %p44 = por %p42, %p43
      %p45 = scmp.ne.s32.totalorder %s37, %s40
      %p46 = scmp.eq.s32.totalorder %s13, 0
      %p47 = por %p45, %p46
      %p48 = scmp.ne.s32.totalorder %s37, %s40
      %p49 = scmp.eq.s32.totalorder %s18, 3
      %p50 = por %p48, %p49
      %p51 = scmp.ne.s32.totalorder %s40, %s41
      %p52 = scmp.eq.s32.totalorder %s18, 0
      %p53 = por %p51, %p52
      %p54 = scmp.ne.s32.totalorder %s40, %s41
      %p55 = scmp.eq.s32.totalorder %s19, 3
      %p56 = por %p54, %p55
      %p58 = scmp.ne.s32.totalorder %s41, %s57
      %p59 = scmp.eq.s32.totalorder %s19, 0
      %p60 = por %p58, %p59
      %s61 = ssub.s32 %s21, %s28
      %p62 = scmp.eq.s32.totalorder %s61, 0
      %s64 = sadd.s32 %s63, 1
      %s65 = scalar_select %p62, %s63, %s64
      %p68 = pneg %p62
      %p69 = scmp.eq.s32.totalorder %s13, 3
      %p70 = por %p68, %p69
      %p71 = scmp.ne.s32.totalorder %s63, %s66
      %p72 = scmp.eq.s32.totalorder %s13, 0
      %p73 = por %p71, %p72
      %p74 = scmp.ne.s32.totalorder %s63, %s66
      %p75 = scmp.eq.s32.totalorder %s18, 3
      %p76 = por %p74, %p75
      %p77 = scmp.ne.s32.totalorder %s66, %s67
      %p78 = scmp.eq.s32.totalorder %s18, 0
      %p79 = por %p77, %p78
      %p80 = scmp.ne.s32.totalorder %s66, %s67
      %p81 = scmp.eq.s32.totalorder %s19, 3
      %p82 = por %p80, %p81
      %p84 = scmp.ne.s32.totalorder %s67, %s83
      %p85 = scmp.eq.s32.totalorder %s19, 0
      %p86 = por %p84, %p85
      %s87 = ssub.s32 %s20, %s32
      %p88 = scmp.eq.s32.totalorder %s87, 0
      %s90 = sadd.s32 %s89, 1
      %s91 = scalar_select %p88, %s89, %s90
      %p94 = pneg %p88
      %p95 = scmp.eq.s32.totalorder %s13, 3
      %p96 = por %p94, %p95
      %p97 = scmp.ne.s32.totalorder %s89, %s92
      %p98 = scmp.eq.s32.totalorder %s13, 0
      %p99 = por %p97, %p98
      %p100 = scmp.ne.s32.totalorder %s89, %s92
      %p101 = scmp.eq.s32.totalorder %s18, 3
      %p102 = por %p100, %p101
      %p103 = scmp.ne.s32.totalorder %s92, %s93
      %p104 = scmp.eq.s32.totalorder %s18, 0
      %p105 = por %p103, %p104
      %p106 = scmp.ne.s32.totalorder %s92, %s93
      %p107 = scmp.eq.s32.totalorder %s19, 3
      %p108 = por %p106, %p107
      %p110 = scmp.ne.s32.totalorder %s93, %s109
      %p111 = scmp.eq.s32.totalorder %s19, 0
      %p112 = por %p110, %p111
      %s114 = sadd.s32 %s113, 1
      %p117 = scmp.eq.s32.totalorder %s13, 3
      %p118 = scmp.ne.s32.totalorder %s113, %s115
      %p119 = scmp.eq.s32.totalorder %s13, 0
      %p120 = por %p118, %p119
      %p121 = scmp.ne.s32.totalorder %s113, %s115
      %p122 = scmp.eq.s32.totalorder %s18, 3
      %p123 = por %p121, %p122
      %p124 = scmp.ne.s32.totalorder %s115, %s116
      %p125 = scmp.eq.s32.totalorder %s18, 0
      %p126 = por %p124, %p125
      %p127 = scmp.ne.s32.totalorder %s115, %s116
      %p128 = scmp.eq.s32.totalorder %s19, 3
      %p129 = por %p127, %p128
      %p131 = scmp.ne.s32.totalorder %s116, %s130
      %p132 = scmp.eq.s32.totalorder %s19, 0
      %p133 = por %p131, %p132
      %s134 = ssub.s32 %s20, %s32
      %p135 = scmp.eq.s32.totalorder %s134, 0
      %s137 = sadd.s32 %s136, 1
      %s138 = scalar_select %p135, %s136, %s137
      %p141 = pneg %p135
      %p142 = scmp.eq.s32.totalorder %s13, 3
      %p143 = por %p141, %p142
      %p144 = scmp.ne.s32.totalorder %s136, %s139
      %p145 = scmp.eq.s32.totalorder %s13, 0
      %p146 = por %p144, %p145
      %p147 = scmp.ne.s32.totalorder %s136, %s139
      %p148 = scmp.eq.s32.totalorder %s18, 3
      %p149 = por %p147, %p148
      %p150 = scmp.ne.s32.totalorder %s139, %s140
      %p151 = scmp.eq.s32.totalorder %s18, 0
      %p152 = por %p150, %p151
      %p153 = scmp.ne.s32.totalorder %s139, %s140
      %p154 = scmp.eq.s32.totalorder %s19, 3
      %p155 = por %p153, %p154
      %p157 = scmp.ne.s32.totalorder %s140, %s156
      %p158 = scmp.eq.s32.totalorder %s19, 0
      %p159 = por %p157, %p158
      %s160 = ssub.s32 %s20, %s32
      %p161 = scmp.eq.s32.totalorder %s160, 0
      %s163 = sadd.s32 %s162, 1
      %s164 = scalar_select %p161, %s162, %s163
      %p167 = pneg %p161
      %p168 = scmp.eq.s32.totalorder %s13, 3
      %p169 = por %p167, %p168
      %p170 = scmp.ne.s32.totalorder %s162, %s165
      %p171 = scmp.eq.s32.totalorder %s13, 0
      %p172 = por %p170, %p171
      %p173 = scmp.ne.s32.totalorder %s162, %s165
      %p174 = scmp.eq.s32.totalorder %s18, 3
      %p175 = por %p173, %p174
      %p176 = scmp.ne.s32.totalorder %s165, %s166
      %p177 = scmp.eq.s32.totalorder %s18, 0
      %p178 = por %p176, %p177
      %p179 = scmp.ne.s32.totalorder %s165, %s166
      %p180 = scmp.eq.s32.totalorder %s19, 3
      %p181 = por %p179, %p180
      %p183 = scmp.ne.s32.totalorder %s166, %s182
      %p184 = scmp.eq.s32.totalorder %s19, 0
      %p185 = por %p183, %p184
      %p186 = scmp.le.s32.totalorder 1, %s13
      %p187 = scmp.lt.s32.totalorder %s13, 5
      %p188 = pnand %p186, %p187
      %p189 = pneg %p188
      // Predicated region
      $region9: #{conv_pool_block.3} parent=5 // pred_check
        _
      $region10: #{conv_pool_block.3} parent=5 // pred_check_branch
        %191 = sbr.rel (%p188) target = $region12
      $region11: #{conv_pool_block.3} parent=5 // pred_region
        %s192 = ssub.s32 %s13, 1
        // Predicated region
        $region13: #{conv_pool_block.3} parent=11 // pred_check
          %p193 = pneg %p126
        $region14: #{conv_pool_block.3} parent=11 // pred_check_branch
          %195 = sbr.rel (%p193) target = $region16
        $region15: #{conv_pool_block.3} parent=11 // pred_region
          _
        $region16: #{conv_pool_block.3} parent=11 // pred_fallthru
          _
      $region12: #{conv_pool_block.3} parent=5 // pred_fallthru
        _
      %p196 = scmp.lt.s32.totalorder %s13, 4
      // Predicated region
      $region17: #{conv_pool_block.3} parent=5 // pred_check
        %p197 = pneg %p196
      $region18: #{conv_pool_block.3} parent=5 // pred_check_branch
        %199 = sbr.rel (%p197) target = $region20
      $region19: #{conv_pool_block.3} parent=5 // pred_region
        // Predicated region
        $region21: #{conv_pool_block.3} parent=19 // pred_check
          %p200 = pneg %p47
        $region22: #{conv_pool_block.3} parent=19 // pred_check_branch
          %202 = sbr.rel (%p200) target = $region24
        $region23: #{conv_pool_block.3} parent=19 // pred_region
          %s203 = sand.u32 %s37, 1
          %s204 = sand.u32 %s37, 1
          %s205 = smul.addr %s204, 256
          %s206 = scalar_lea.vmem [#allocation4], %s205
          %s207 = smul.u32 32, %s20
          %s208 = smul.u32 2, %s21
          %s209 = smul.addr %s207, 4
          %s210 = sadd.s32 %s208, %s209
          %s211 = smul.addr %s210, 4
          %s212 = scalar_lea.vmem %s0, %s211
          // Predicated region
          $region25: #{conv_pool_block.3} parent=23 // pred_check
            _
          $region26: #{conv_pool_block.3} parent=23 // pred_check_branch
            %214 = sbr.rel (0) target = $region28
          $region27: #{conv_pool_block.3} parent=23 // pred_region
            // Predicated region
            $region29: #{conv_pool_block.3} parent=27 // pred_check
              _
            $region30: #{conv_pool_block.3} parent=27 // pred_check_branch
              %216 = sbr.rel (0) target = $region32
            $region31: #{conv_pool_block.3} parent=27 // pred_region
              // Predicated region
              $region44: #{conv_pool_block.3} parent=31 // pred_check
                _
              $region45: #{conv_pool_block.3} parent=31 // pred_check_branch
                %294 = sbr.rel (0) target = $region47
              $region46: #{conv_pool_block.3} parent=31 // pred_region
                loop: start=0, step=1, limit=1
                $region48: #{conv_pool_block.3} parent=46 // loop_pre_header
                  _
                $region49: #{conv_pool_block.3} parent=46 // loop_header
                  %s296 = sphi 0, %s300
                  %p297 = scmp.ge.s32.totalorder %s296, 1
                  %s301 = sphi %s212, %s212
                  %s302 = sphi %s206, %s206
                $region50: #{conv_pool_block.3} parent=46 // loop_header_branch
                  %299 = sbr.rel (%p297) target = $region54
                $region51: #{conv_pool_block.3} parent=46 // loop_body
                  %v303 = vld [vmem:[%s301] sm:$0xff]
                  %304 = vst [vmem:[%s302] sm:$0xff] %v303
                  %v305 = vld [vmem:[%s301 + $0x10] sm:$0xff]
                  %306 = vst [vmem:[%s302 + $0x8] sm:$0xff] %v305
                  %v307 = vld [vmem:[%s301 + $0x20] sm:$0xff]
                  %308 = vst [vmem:[%s302 + $0x10] sm:$0xff] %v307
                  %v309 = vld [vmem:[%s301 + $0x30] sm:$0xff]
                  %310 = vst [vmem:[%s302 + $0x18] sm:$0xff] %v309
                  %v311 = vld [vmem:[%s301 + $0x40] sm:$0xff]
                  %312 = vst [vmem:[%s302 + $0x20] sm:$0xff] %v311
                  %v313 = vld [vmem:[%s301 + $0x50] sm:$0xff]
                  %314 = vst [vmem:[%s302 + $0x28] sm:$0xff] %v313
                  %v315 = vld [vmem:[%s301 + $0x60] sm:$0xff]
                  %316 = vst [vmem:[%s302 + $0x30] sm:$0xff] %v315
                  %v317 = vld [vmem:[%s301 + $0x70] sm:$0xff]
                  %318 = vst [vmem:[%s302 + $0x38] sm:$0xff] %v317
                  %v319 = vld [vmem:[%s301 + $0x80] sm:$0xff]
                  %320 = vst [vmem:[%s302 + $0x40] sm:$0xff] %v319
                  %v321 = vld [vmem:[%s301 + $0x90] sm:$0xff]
                  %322 = vst [vmem:[%s302 + $0x48] sm:$0xff] %v321
                  %v323 = vld [vmem:[%s301 + $0xa0] sm:$0xff]
                  %324 = vst [vmem:[%s302 + $0x50] sm:$0xff] %v323
                  %v325 = vld [vmem:[%s301 + $0xb0] sm:$0xff]
                  %326 = vst [vmem:[%s302 + $0x58] sm:$0xff] %v325
                  %v327 = vld [vmem:[%s301 + $0xc0] sm:$0xff]
                  %328 = vst [vmem:[%s302 + $0x60] sm:$0xff] %v327
                  %v329 = vld [vmem:[%s301 + $0xd0] sm:$0xff]
                  %330 = vst [vmem:[%s302 + $0x68] sm:$0xff] %v329
                  %v331 = vld [vmem:[%s301 + $0xe0] sm:$0xff]
                  %332 = vst [vmem:[%s302 + $0x70] sm:$0xff] %v331
                  %v333 = vld [vmem:[%s301 + $0xf0] sm:$0xff]
                  %334 = vst [vmem:[%s302 + $0x78] sm:$0xff] %v333
                  %v335 = vld [vmem:[%s301 + $0x100] sm:$0xff]
                  %336 = vst [vmem:[%s302 + $0x80] sm:$0xff] %v335
                  %v337 = vld [vmem:[%s301 + $0x110] sm:$0xff]
                  %338 = vst [vmem:[%s302 + $0x88] sm:$0xff] %v337
                  %v339 = vld [vmem:[%s301 + $0x120] sm:$0xff]
                  %340 = vst [vmem:[%s302 + $0x90] sm:$0xff] %v339
                  %v341 = vld [vmem:[%s301 + $0x130] sm:$0xff]
                  %342 = vst [vmem:[%s302 + $0x98] sm:$0xff] %v341
                  %v343 = vld [vmem:[%s301 + $0x140] sm:$0xff]
                  %344 = vst [vmem:[%s302 + $0xa0] sm:$0xff] %v343
                  %v345 = vld [vmem:[%s301 + $0x150] sm:$0xff]
                  %346 = vst [vmem:[%s302 + $0xa8] sm:$0xff] %v345
                  %v347 = vld [vmem:[%s301 + $0x160] sm:$0xff]
                  %348 = vst [vmem:[%s302 + $0xb0] sm:$0xff] %v347
                  %v349 = vld [vmem:[%s301 + $0x170] sm:$0xff]
                  %350 = vst [vmem:[%s302 + $0xb8] sm:$0xff] %v349
                  %v351 = vld [vmem:[%s301 + $0x180] sm:$0xff]
                  %352 = vst [vmem:[%s302 + $0xc0] sm:$0xff] %v351
                  %v353 = vld [vmem:[%s301 + $0x190] sm:$0xff]
                  %354 = vst [vmem:[%s302 + $0xc8] sm:$0xff] %v353
                  %v355 = vld [vmem:[%s301 + $0x1a0] sm:$0xff]
                  %356 = vst [vmem:[%s302 + $0xd0] sm:$0xff] %v355
                  %v357 = vld [vmem:[%s301 + $0x1b0] sm:$0xff]
                  %358 = vst [vmem:[%s302 + $0xd8] sm:$0xff] %v357
                  %v359 = vld [vmem:[%s301 + $0x1c0] sm:$0xff]
                  %360 = vst [vmem:[%s302 + $0xe0] sm:$0xff] %v359
                  %v361 = vld [vmem:[%s301 + $0x1d0] sm:$0xff]
                  %362 = vst [vmem:[%s302 + $0xe8] sm:$0xff] %v361
                  %v363 = vld [vmem:[%s301 + $0x1e0] sm:$0xff]
                  %364 = vst [vmem:[%s302 + $0xf0] sm:$0xff] %v363
                  %v365 = vld [vmem:[%s301 + $0x1f0] sm:$0xff]
                  %366 = vst [vmem:[%s302 + $0xf8] sm:$0xff] %v365
                $region52: #{conv_pool_block.3} parent=46 // loop_footer
                  %s300 = sadd.s32 1, %s296
                $region53: #{conv_pool_block.3} parent=46 // loop_footer_branch
                  %295 = sbr.rel target = $region49
                $region54: #{conv_pool_block.3} parent=46 // loop_exit
                  _
              $region47: #{conv_pool_block.3} parent=31 // pred_fallthru
                _
              // Predicated region
              $region55: #{conv_pool_block.3} parent=31 // pred_check
                _
              $region56: #{conv_pool_block.3} parent=31 // pred_check_branch
                %368 = sbr.rel target = $region58
              $region57: #{conv_pool_block.3} parent=31 // pred_region
                _
              $region58: #{conv_pool_block.3} parent=31 // pred_fallthru
                _
            $region32: #{conv_pool_block.3} parent=27 // pred_fallthru
              _
            // Predicated region
            $region33: #{conv_pool_block.3} parent=27 // pred_check
              _
            $region34: #{conv_pool_block.3} parent=27 // pred_check_branch
              %218 = sbr.rel target = $region36
            $region35: #{conv_pool_block.3} parent=27 // pred_region
              %s220 = ssub.s32 256, 1
              loop: start=0, step=1, limit=1
              $region37: #{conv_pool_block.3} parent=35 // loop_pre_header
                _
              $region38: #{conv_pool_block.3} parent=35 // loop_header
                %s222 = sphi 0, %s226
                %p223 = scmp.ge.s32.totalorder %s222, 1
                %s227 = sphi %s212, %s212
                %s228 = sphi %s206, %s206
              $region39: #{conv_pool_block.3} parent=35 // loop_header_branch
                %225 = sbr.rel (%p223) target = $region43
              $region40: #{conv_pool_block.3} parent=35 // loop_body
                %v229 = vld [vmem:[%s227] sm:%s220]
                %230 = vst [vmem:[%s228] sm:%s220] %v229
                %v231 = vld [vmem:[%s227 + $0x10] sm:%s220]
                %232 = vst [vmem:[%s228 + $0x8] sm:%s220] %v231
                %v233 = vld [vmem:[%s227 + $0x20] sm:%s220]
                %234 = vst [vmem:[%s228 + $0x10] sm:%s220] %v233
                %v235 = vld [vmem:[%s227 + $0x30] sm:%s220]
                %236 = vst [vmem:[%s228 + $0x18] sm:%s220] %v235
                %v237 = vld [vmem:[%s227 + $0x40] sm:%s220]
                %238 = vst [vmem:[%s228 + $0x20] sm:%s220] %v237
                %v239 = vld [vmem:[%s227 + $0x50] sm:%s220]
                %240 = vst [vmem:[%s228 + $0x28] sm:%s220] %v239
                %v241 = vld [vmem:[%s227 + $0x60] sm:%s220]
                %242 = vst [vmem:[%s228 + $0x30] sm:%s220] %v241
                %v243 = vld [vmem:[%s227 + $0x70] sm:%s220]
                %244 = vst [vmem:[%s228 + $0x38] sm:%s220] %v243
                %v245 = vld [vmem:[%s227 + $0x80] sm:%s220]
                %246 = vst [vmem:[%s228 + $0x40] sm:%s220] %v245
                %v247 = vld [vmem:[%s227 + $0x90] sm:%s220]
                %248 = vst [vmem:[%s228 + $0x48] sm:%s220] %v247
                %v249 = vld [vmem:[%s227 + $0xa0] sm:%s220]
                %250 = vst [vmem:[%s228 + $0x50] sm:%s220] %v249
                %v251 = vld [vmem:[%s227 + $0xb0] sm:%s220]
                %252 = vst [vmem:[%s228 + $0x58] sm:%s220] %v251
                %v253 = vld [vmem:[%s227 + $0xc0] sm:%s220]
                %254 = vst [vmem:[%s228 + $0x60] sm:%s220] %v253
                %v255 = vld [vmem:[%s227 + $0xd0] sm:%s220]
                %256 = vst [vmem:[%s228 + $0x68] sm:%s220] %v255
                %v257 = vld [vmem:[%s227 + $0xe0] sm:%s220]
                %258 = vst [vmem:[%s228 + $0x70] sm:%s220] %v257
                %v259 = vld [vmem:[%s227 + $0xf0] sm:%s220]
                %260 = vst [vmem:[%s228 + $0x78] sm:%s220] %v259
                %v261 = vld [vmem:[%s227 + $0x100] sm:%s220]
                %262 = vst [vmem:[%s228 + $0x80] sm:%s220] %v261
                %v263 = vld [vmem:[%s227 + $0x110] sm:%s220]
                %264 = vst [vmem:[%s228 + $0x88] sm:%s220] %v263
                %v265 = vld [vmem:[%s227 + $0x120] sm:%s220]
                %266 = vst [vmem:[%s228 + $0x90] sm:%s220] %v265
                %v267 = vld [vmem:[%s227 + $0x130] sm:%s220]
                %268 = vst [vmem:[%s228 + $0x98] sm:%s220] %v267
                %v269 = vld [vmem:[%s227 + $0x140] sm:%s220]
                %270 = vst [vmem:[%s228 + $0xa0] sm:%s220] %v269
                %v271 = vld [vmem:[%s227 + $0x150] sm:%s220]
                %272 = vst [vmem:[%s228 + $0xa8] sm:%s220] %v271
                %v273 = vld [vmem:[%s227 + $0x160] sm:%s220]
                %274 = vst [vmem:[%s228 + $0xb0] sm:%s220] %v273
                %v275 = vld [vmem:[%s227 + $0x170] sm:%s220]
                %276 = vst [vmem:[%s228 + $0xb8] sm:%s220] %v275
                %v277 = vld [vmem:[%s227 + $0x180] sm:%s220]
                %278 = vst [vmem:[%s228 + $0xc0] sm:%s220] %v277
                %v279 = vld [vmem:[%s227 + $0x190] sm:%s220]
                %280 = vst [vmem:[%s228 + $0xc8] sm:%s220] %v279
                %v281 = vld [vmem:[%s227 + $0x1a0] sm:%s220]
                %282 = vst [vmem:[%s228 + $0xd0] sm:%s220] %v281
                %v283 = vld [vmem:[%s227 + $0x1b0] sm:%s220]
                %284 = vst [vmem:[%s228 + $0xd8] sm:%s220] %v283
                %v285 = vld [vmem:[%s227 + $0x1c0] sm:%s220]
                %286 = vst [vmem:[%s228 + $0xe0] sm:%s220] %v285
                %v287 = vld [vmem:[%s227 + $0x1d0] sm:%s220]
                %288 = vst [vmem:[%s228 + $0xe8] sm:%s220] %v287
                %v289 = vld [vmem:[%s227 + $0x1e0] sm:%s220]
                %290 = vst [vmem:[%s228 + $0xf0] sm:%s220] %v289
                %v291 = vld [vmem:[%s227 + $0x1f0] sm:%s220]
                %292 = vst [vmem:[%s228 + $0xf8] sm:%s220] %v291
              $region41: #{conv_pool_block.3} parent=35 // loop_footer
                %s226 = sadd.s32 1, %s222
              $region42: #{conv_pool_block.3} parent=35 // loop_footer_branch
                %221 = sbr.rel target = $region38
              $region43: #{conv_pool_block.3} parent=35 // loop_exit
                _
            $region36: #{conv_pool_block.3} parent=27 // pred_fallthru
              _
          $region28: #{conv_pool_block.3} parent=23 // pred_fallthru
            _
          %369 = vnop
        $region24: #{conv_pool_block.3} parent=19 // pred_fallthru
          _
        // Predicated region
        $region59: #{conv_pool_block.3} parent=19 // pred_check
          %p370 = pneg %p73
        $region60: #{conv_pool_block.3} parent=19 // pred_check_branch
          %372 = sbr.rel (%p370) target = $region62
        $region61: #{conv_pool_block.3} parent=19 // pred_region
          %s373 = smul.u32 32, %s21
          %p374 = scmp.lt.s32.totalorder %s373, 63
          %s375 = scalar_select %p374, %s373, 63
          %s376 = smul.addr %s375, 4
          %s377 = scalar_lea.vmem %s1, %s376
          %s378 = smul.u32 32, %s21
        $region62: #{conv_pool_block.3} parent=19 // pred_fallthru
          _
        // Predicated region
        $region63: #{conv_pool_block.3} parent=19 // pred_check
          %p379 = pneg %p99
        $region64: #{conv_pool_block.3} parent=19 // pred_check_branch
          %381 = sbr.rel (%p379) target = $region66
        $region65: #{conv_pool_block.3} parent=19 // pred_region
          %s382 = smul.u32 32, %s20
          %p383 = scmp.lt.s32.totalorder %s382, 63
          %s384 = scalar_select %p383, %s382, 63
          %s385 = smul.addr %s384, 8
          %s386 = scalar_lea.vmem %s2, %s385
          %s387 = smul.u32 32, %s20
        $region66: #{conv_pool_block.3} parent=19 // pred_fallthru
          _
      $region20: #{conv_pool_block.3} parent=5 // pred_fallthru
        _
      %p388 = scmp.le.s32.totalorder 1, %s13
      %p389 = scmp.lt.s32.totalorder %s13, 5
      %p390 = pnand %p388, %p389
      %p391 = pneg %p390
      // Predicated region
      $region67: #{conv_pool_block.3} parent=5 // pred_check
        _
      $region68: #{conv_pool_block.3} parent=5 // pred_check_branch
        %393 = sbr.rel (%p390) target = $region70
      $region69: #{conv_pool_block.3} parent=5 // pred_region
        %s394 = ssub.s32 %s13, 1
        %s395 = sand.u32 %s40, 1
        %s396 = sand.u32 %s40, 1
        %s397 = smul.addr %s396, 256
        %s398 = scalar_lea.vmem [#allocation4], %s397
        // Predicated region
        $region71: #{conv_pool_block.3} parent=69 // pred_check
          %p399 = pneg %p53
        $region72: #{conv_pool_block.3} parent=69 // pred_check_branch
          %401 = sbr.rel (%p399) target = $region74
        $region73: #{conv_pool_block.3} parent=69 // pred_region
          _
        $region74: #{conv_pool_block.3} parent=69 // pred_fallthru
          _
        %s402 = sand.u32 %s40, 1
        %s403 = sand.u32 %s40, 1
        %s404 = smul.addr %s403, 256
        %s405 = scalar_lea.vmem [#allocation4], %s404
        %p406 = pneg %p53
        %p407 = pneg %p50
        %s408 = smul.u32 32, %s23
        %p409 = scmp.lt.s32.totalorder %s408, 63
        %s410 = scalar_select %p409, %s408, 63
        %s411 = smul.addr %s410, 4
        %s412 = scalar_lea.vmem %s1, %s411
        %p413 = pneg %p79
        %p414 = pneg %p76
        %s415 = smul.u32 32, %s22
        %p416 = scmp.lt.s32.totalorder %s415, 63
        %s417 = scalar_select %p416, %s415, 63
        %s418 = smul.addr %s417, 8
        %s419 = scalar_lea.vmem %s2, %s418
        %p420 = pneg %p105
        %p421 = pneg %p102
        %p422 = pneg %p126
        %p423 = pneg %p123
        %p424 = pneg %p152
        %p425 = pneg %p149
        %s426 = smul.u32 32, %s22
        %p427 = scmp.lt.s32.totalorder %s426, 63
        %s428 = scalar_select %p427, %s426, 63
        %s429 = smul.addr %s428, 8
        %s430 = scalar_lea.vmem %s4, %s429
        %p431 = pneg %p178
        %p432 = pneg %p175
        %s433 = smul.u32 32, %s22
        %p434 = scmp.lt.s32.totalorder %s433, 63
        %s435 = scalar_select %p434, %s433, 63
        %s436 = smul.addr %s435, 8
        %s437 = scalar_lea.vmem %s5, %s436
        %s438 = smul.u32 32, %s22
        %s439 = smul.u32 2, %s23
        %s440 = smul.u32 32, %s23
        %p441 = scmp.lt.s32.totalorder %s440, 63
        %s442 = scalar_select %p441, %s440, 63
        %s443 = smul.addr %s442, 4
        %s444 = scalar_lea.vmem %s1, %s443
        %s445 = smul.u32 32, %s23
        %s446 = smul.u32 32, %s22
        %p447 = scmp.lt.s32.totalorder %s446, 63
        %s448 = scalar_select %p447, %s446, 63
        %s449 = smul.addr %s448, 8
        %s450 = scalar_lea.vmem %s2, %s449
        %s451 = smul.u32 32, %s22
        %s452 = smul.u32 32, %s22
        %p453 = scmp.lt.s32.totalorder %s452, 63
        %s454 = scalar_select %p453, %s452, 63
        %s455 = smul.addr %s454, 8
        %s456 = scalar_lea.vmem %s4, %s455
        %s457 = smul.u32 32, %s22
        %s458 = smul.u32 32, %s22
        %p459 = scmp.lt.s32.totalorder %s458, 63
        %s460 = scalar_select %p459, %s458, 63
        %s461 = smul.addr %s460, 8
        %s462 = scalar_lea.vmem %s5, %s461
        %s463 = smul.u32 32, %s22
        %p464 = scmp.eq.s32.totalorder %s23, 0
        // Predicated region
        $region75: #{conv_pool_block.3} parent=69 // pred_check
          %p465 = pneg %p464
        $region76: #{conv_pool_block.3} parent=69 // pred_check_branch
          %467 = sbr.rel (%p465) target = $region78
        $region77: #{conv_pool_block.3} parent=69 // pred_region
          %vm468 = vcmask 7168
          %469 = vst.msk [vmem:[#allocation2] sm:$0xff] %vm468, 0.0
          %470 = vst.msk [vmem:[#allocation2 + $0x8] sm:$0xff] %vm468, 0.0
          %471 = vst.msk [vmem:[#allocation2 + $0x10] sm:$0xff] %vm468, 0.0
          %472 = vst.msk [vmem:[#allocation2 + $0x18] sm:$0xff] %vm468, 0.0
          %473 = vst.msk [vmem:[#allocation2 + $0x20] sm:$0xff] %vm468, 0.0
          %474 = vst.msk [vmem:[#allocation2 + $0x28] sm:$0xff] %vm468, 0.0
          %475 = vst.msk [vmem:[#allocation2 + $0x30] sm:$0xff] %vm468, 0.0
          %476 = vst.msk [vmem:[#allocation2 + $0x38] sm:$0xff] %vm468, 0.0
          %477 = vst.msk [vmem:[#allocation2 + $0x40] sm:$0xff] %vm468, 0.0
          %478 = vst.msk [vmem:[#allocation2 + $0x48] sm:$0xff] %vm468, 0.0
          %479 = vst.msk [vmem:[#allocation2 + $0x50] sm:$0xff] %vm468, 0.0
          %480 = vst.msk [vmem:[#allocation2 + $0x58] sm:$0xff] %vm468, 0.0
          %481 = vst.msk [vmem:[#allocation2 + $0x60] sm:$0xff] %vm468, 0.0
          %482 = vst.msk [vmem:[#allocation2 + $0x68] sm:$0xff] %vm468, 0.0
          %483 = vst.msk [vmem:[#allocation2 + $0x70] sm:$0xff] %vm468, 0.0
          %484 = vst.msk [vmem:[#allocation2 + $0x78] sm:$0xff] %vm468, 0.0
          %485 = vst.msk [vmem:[#allocation2 + $0x80] sm:$0xff] %vm468, 0.0
          %486 = vst.msk [vmem:[#allocation2 + $0x88] sm:$0xff] %vm468, 0.0
          %487 = vst.msk [vmem:[#allocation2 + $0x90] sm:$0xff] %vm468, 0.0
          %488 = vst.msk [vmem:[#allocation2 + $0x98] sm:$0xff] %vm468, 0.0
          %489 = vst.msk [vmem:[#allocation2 + $0xa0] sm:$0xff] %vm468, 0.0
          %490 = vst.msk [vmem:[#allocation2 + $0xa8] sm:$0xff] %vm468, 0.0
          %491 = vst.msk [vmem:[#allocation2 + $0xb0] sm:$0xff] %vm468, 0.0
          %492 = vst.msk [vmem:[#allocation2 + $0xb8] sm:$0xff] %vm468, 0.0
          %493 = vst.msk [vmem:[#allocation2 + $0xc0] sm:$0xff] %vm468, 0.0
          %494 = vst.msk [vmem:[#allocation2 + $0xc8] sm:$0xff] %vm468, 0.0
          %495 = vst.msk [vmem:[#allocation2 + $0xd0] sm:$0xff] %vm468, 0.0
          %496 = vst.msk [vmem:[#allocation2 + $0xd8] sm:$0xff] %vm468, 0.0
          %497 = vst.msk [vmem:[#allocation2 + $0xe0] sm:$0xff] %vm468, 0.0
          %498 = vst.msk [vmem:[#allocation2 + $0xe8] sm:$0xff] %vm468, 0.0
          %499 = vst.msk [vmem:[#allocation2 + $0xf0] sm:$0xff] %vm468, 0.0
          %500 = vst.msk [vmem:[#allocation2 + $0xf8] sm:$0xff] %vm468, 0.0
        $region78: #{conv_pool_block.3} parent=69 // pred_fallthru
          _
        %v501 = vld [vmem:[#allocation2] sm:$0xff]
        %v502 = vld [vmem:[#allocation2 + $0x8] sm:$0xff]
        %v503 = vld [vmem:[#allocation2 + $0x10] sm:$0xff]
        %v504 = vld [vmem:[#allocation2 + $0x18] sm:$0xff]
        %v505 = vld [vmem:[#allocation2 + $0x20] sm:$0xff]
        %v506 = vld [vmem:[#allocation2 + $0x28] sm:$0xff]
        %v507 = vld [vmem:[#allocation2 + $0x30] sm:$0xff]
        %v508 = vld [vmem:[#allocation2 + $0x38] sm:$0xff]
        %v509 = vld [vmem:[#allocation2 + $0x40] sm:$0xff]
        %v510 = vld [vmem:[#allocation2 + $0x48] sm:$0xff]
        %v511 = vld [vmem:[#allocation2 + $0x50] sm:$0xff]
        %v512 = vld [vmem:[#allocation2 + $0x58] sm:$0xff]
        %v513 = vld [vmem:[#allocation2 + $0x60] sm:$0xff]
        %v514 = vld [vmem:[#allocation2 + $0x68] sm:$0xff]
        %v515 = vld [vmem:[#allocation2 + $0x70] sm:$0xff]
        %v516 = vld [vmem:[#allocation2 + $0x78] sm:$0xff]
        %v517 = vld [vmem:[#allocation2 + $0x80] sm:$0xff]
        %v518 = vld [vmem:[#allocation2 + $0x88] sm:$0xff]
        %v519 = vld [vmem:[#allocation2 + $0x90] sm:$0xff]
        %v520 = vld [vmem:[#allocation2 + $0x98] sm:$0xff]
        %v521 = vld [vmem:[#allocation2 + $0xa0] sm:$0xff]
        %v522 = vld [vmem:[#allocation2 + $0xa8] sm:$0xff]
        %v523 = vld [vmem:[#allocation2 + $0xb0] sm:$0xff]
        %v524 = vld [vmem:[#allocation2 + $0xb8] sm:$0xff]
        %v525 = vld [vmem:[#allocation2 + $0xc0] sm:$0xff]
        %v526 = vld [vmem:[#allocation2 + $0xc8] sm:$0xff]
        %v527 = vld [vmem:[#allocation2 + $0xd0] sm:$0xff]
        %v528 = vld [vmem:[#allocation2 + $0xd8] sm:$0xff]
        %v529 = vld [vmem:[#allocation2 + $0xe0] sm:$0xff]
        %v530 = vld [vmem:[#allocation2 + $0xe8] sm:$0xff]
        %v531 = vld [vmem:[#allocation2 + $0xf0] sm:$0xff]
        %v532 = vld [vmem:[#allocation2 + $0xf8] sm:$0xff]
        %v533 = vld [vmem:[%s398] sm:$0xff]
        %v534 = vld [vmem:[%s398 + $0x8] sm:$0xff]
        %v535 = vld [vmem:[%s398 + $0x10] sm:$0xff]
        %v536 = vld [vmem:[%s398 + $0x18] sm:$0xff]
        %v537 = vld [vmem:[%s398 + $0x20] sm:$0xff]
        %v538 = vld [vmem:[%s398 + $0x28] sm:$0xff]
        %v539 = vld [vmem:[%s398 + $0x30] sm:$0xff]
        %v540 = vld [vmem:[%s398 + $0x38] sm:$0xff]
        %v541 = vld [vmem:[%s398 + $0x40] sm:$0xff]
        %v542 = vld [vmem:[%s398 + $0x48] sm:$0xff]
        %v543 = vld [vmem:[%s398 + $0x50] sm:$0xff]
        %v544 = vld [vmem:[%s398 + $0x58] sm:$0xff]
        %v545 = vld [vmem:[%s398 + $0x60] sm:$0xff]
        %v546 = vld [vmem:[%s398 + $0x68] sm:$0xff]
        %v547 = vld [vmem:[%s398 + $0x70] sm:$0xff]
        %v548 = vld [vmem:[%s398 + $0x78] sm:$0xff]
        %v549 = vld [vmem:[%s398 + $0x80] sm:$0xff]
        %v550 = vld [vmem:[%s398 + $0x88] sm:$0xff]
        %v551 = vld [vmem:[%s398 + $0x90] sm:$0xff]
        %v552 = vld [vmem:[%s398 + $0x98] sm:$0xff]
        %v553 = vld [vmem:[%s398 + $0xa0] sm:$0xff]
        %v554 = vld [vmem:[%s398 + $0xa8] sm:$0xff]
        %v555 = vld [vmem:[%s398 + $0xb0] sm:$0xff]
        %v556 = vld [vmem:[%s398 + $0xb8] sm:$0xff]
        %v557 = vld [vmem:[%s398 + $0xc0] sm:$0xff]
        %v558 = vld [vmem:[%s398 + $0xc8] sm:$0xff]
        %v559 = vld [vmem:[%s398 + $0xd0] sm:$0xff]
        %v560 = vld [vmem:[%s398 + $0xd8] sm:$0xff]
        %v561 = vld [vmem:[%s398 + $0xe0] sm:$0xff]
        %v562 = vld [vmem:[%s398 + $0xe8] sm:$0xff]
        %v563 = vld [vmem:[%s398 + $0xf0] sm:$0xff]
        %v564 = vld [vmem:[%s398 + $0xf8] sm:$0xff]
        %v565 = vld [vmem:[%s444] sm:$0xf]
        %v566 = vld [vmem:[%s444 + $0x4] sm:$0xf]
        %v567 = vld [vmem:[%s444 + $0x8] sm:$0xf]
        %v568 = vld [vmem:[%s444 + $0xc] sm:$0xf]
        %v569 = vld [vmem:[%s444 + $0x10] sm:$0xf]
        %v570 = vld [vmem:[%s444 + $0x14] sm:$0xf]
        %v571 = vld [vmem:[%s444 + $0x18] sm:$0xf]
        %v572 = vld [vmem:[%s444 + $0x1c] sm:$0xf]
        %v573 = vld [vmem:[%s444 + $0x20] sm:$0xf]
        %v574 = vld [vmem:[%s444 + $0x24] sm:$0xf]
        %v575 = vld [vmem:[%s444 + $0x28] sm:$0xf]
        %v576 = vld [vmem:[%s444 + $0x2c] sm:$0xf]
        %v577 = vld [vmem:[%s444 + $0x30] sm:$0xf]
        %v578 = vld [vmem:[%s444 + $0x34] sm:$0xf]
        %v579 = vld [vmem:[%s444 + $0x38] sm:$0xf]
        %v580 = vld [vmem:[%s444 + $0x3c] sm:$0xf]
        %v581 = vld [vmem:[%s444 + $0x40] sm:$0xf]
        %v582 = vld [vmem:[%s444 + $0x44] sm:$0xf]
        %v583 = vld [vmem:[%s444 + $0x48] sm:$0xf]
        %v584 = vld [vmem:[%s444 + $0x4c] sm:$0xf]
        %v585 = vld [vmem:[%s444 + $0x50] sm:$0xf]
        %v586 = vld [vmem:[%s444 + $0x54] sm:$0xf]
        %v587 = vld [vmem:[%s444 + $0x58] sm:$0xf]
        %v588 = vld [vmem:[%s444 + $0x5c] sm:$0xf]
        %v589 = vld [vmem:[%s444 + $0x60] sm:$0xf]
        %v590 = vld [vmem:[%s444 + $0x64] sm:$0xf]
        %v591 = vld [vmem:[%s444 + $0x68] sm:$0xf]
        %v592 = vld [vmem:[%s444 + $0x6c] sm:$0xf]
        %v593 = vld [vmem:[%s444 + $0x70] sm:$0xf]
        %v594 = vld [vmem:[%s444 + $0x74] sm:$0xf]
        %v595 = vld [vmem:[%s444 + $0x78] sm:$0xf]
        %v596 = vld [vmem:[%s444 + $0x7c] sm:$0xf]
        %v629 = vunpack.c.l.b16 %v533
        %v630 = vunpack.c.h.b16 %v533
        %v631 = vunpack.c.l.b16 %v534
        %v632 = vunpack.c.h.b16 %v534
        %v633 = vunpack.c.l.b16 %v535
        %v634 = vunpack.c.h.b16 %v535
        %v635 = vunpack.c.l.b16 %v536
        %v636 = vunpack.c.h.b16 %v536
        %v637 = vunpack.c.l.b16 %v537
        %v638 = vunpack.c.h.b16 %v537
        %v639 = vunpack.c.l.b16 %v538
        %v640 = vunpack.c.h.b16 %v538
        %v641 = vunpack.c.l.b16 %v539
        %v642 = vunpack.c.h.b16 %v539
        %v643 = vunpack.c.l.b16 %v540
        %v644 = vunpack.c.h.b16 %v540
        %v645 = vunpack.c.l.b16 %v541
        %v646 = vunpack.c.h.b16 %v541
        %v647 = vunpack.c.l.b16 %v542
        %v648 = vunpack.c.h.b16 %v542
        %v649 = vunpack.c.l.b16 %v543
        %v650 = vunpack.c.h.b16 %v543
        %v651 = vunpack.c.l.b16 %v544
        %v652 = vunpack.c.h.b16 %v544
        %v653 = vunpack.c.l.b16 %v545
        %v654 = vunpack.c.h.b16 %v545
        %v655 = vunpack.c.l.b16 %v546
        %v656 = vunpack.c.h.b16 %v546
        %v657 = vunpack.c.l.b16 %v547
        %v658 = vunpack.c.h.b16 %v547
        %v659 = vunpack.c.l.b16 %v548
        %v660 = vunpack.c.h.b16 %v548
        %v661 = vunpack.c.l.b16 %v549
        %v662 = vunpack.c.h.b16 %v549
        %v663 = vunpack.c.l.b16 %v550
        %v664 = vunpack.c.h.b16 %v550
        %v665 = vunpack.c.l.b16 %v551
        %v666 = vunpack.c.h.b16 %v551
        %v667 = vunpack.c.l.b16 %v552
        %v668 = vunpack.c.h.b16 %v552
        %v669 = vunpack.c.l.b16 %v553
        %v670 = vunpack.c.h.b16 %v553
        %v671 = vunpack.c.l.b16 %v554
        %v672 = vunpack.c.h.b16 %v554
        %v673 = vunpack.c.l.b16 %v555
        %v674 = vunpack.c.h.b16 %v555
        %v675 = vunpack.c.l.b16 %v556
        %v676 = vunpack.c.h.b16 %v556
        %v677 = vunpack.c.l.b16 %v557
        %v678 = vunpack.c.h.b16 %v557
        %v679 = vunpack.c.l.b16 %v558
        %v680 = vunpack.c.h.b16 %v558
        %v681 = vunpack.c.l.b16 %v559
        %v682 = vunpack.c.h.b16 %v559
        %v683 = vunpack.c.l.b16 %v560
        %v684 = vunpack.c.h.b16 %v560
        %v685 = vunpack.c.l.b16 %v561
        %v686 = vunpack.c.h.b16 %v561
        %v687 = vunpack.c.l.b16 %v562
        %v688 = vunpack.c.h.b16 %v562
        %v689 = vunpack.c.l.b16 %v563
        %v690 = vunpack.c.h.b16 %v563
        %v691 = vunpack.c.l.b16 %v564
        %v692 = vunpack.c.h.b16 %v564
        %v693 = vpack.c.b16 %v631, %v629
        %v694 = vpack.c.b16 %v632, %v630
        %v695 = vpack.c.b16 %v635, %v633
        %v696 = vpack.c.b16 %v636, %v634
        %v697 = vpack.c.b16 %v639, %v637
        %v698 = vpack.c.b16 %v640, %v638
        %v699 = vpack.c.b16 %v643, %v641
        %v700 = vpack.c.b16 %v644, %v642
        %v701 = vpack.c.b16 %v647, %v645
        %v702 = vpack.c.b16 %v648, %v646
        %v703 = vpack.c.b16 %v651, %v649
        %v704 = vpack.c.b16 %v652, %v650
        %v705 = vpack.c.b16 %v655, %v653
        %v706 = vpack.c.b16 %v656, %v654
        %v707 = vpack.c.b16 %v659, %v657
        %v708 = vpack.c.b16 %v660, %v658
        %v709 = vpack.c.b16 %v663, %v661
        %v710 = vpack.c.b16 %v664, %v662
        %v711 = vpack.c.b16 %v667, %v665
        %v712 = vpack.c.b16 %v668, %v666
        %v713 = vpack.c.b16 %v671, %v669
        %v714 = vpack.c.b16 %v672, %v670
        %v715 = vpack.c.b16 %v675, %v673
        %v716 = vpack.c.b16 %v676, %v674
        %v717 = vpack.c.b16 %v679, %v677
        %v718 = vpack.c.b16 %v680, %v678
        %v719 = vpack.c.b16 %v683, %v681
        %v720 = vpack.c.b16 %v684, %v682
        %v721 = vpack.c.b16 %v687, %v685
        %v722 = vpack.c.b16 %v688, %v686
        %v723 = vpack.c.b16 %v691, %v689
        %v724 = vpack.c.b16 %v692, %v690
        %v789 = vunpack.c.l.b16 %v565
        %v790 = vunpack.c.l.b16 %v566
        %v791 = vunpack.c.l.b16 %v567
        %v792 = vunpack.c.l.b16 %v568
        %v793 = vunpack.c.l.b16 %v569
        %v794 = vunpack.c.l.b16 %v570
        %v795 = vunpack.c.l.b16 %v571
        %v796 = vunpack.c.l.b16 %v572
        %v797 = vunpack.c.l.b16 %v573
        %v798 = vunpack.c.l.b16 %v574
        %v799 = vunpack.c.l.b16 %v575
        %v800 = vunpack.c.l.b16 %v576
        %v801 = vunpack.c.l.b16 %v577
        %v802 = vunpack.c.l.b16 %v578
        %v803 = vunpack.c.l.b16 %v579
        %v804 = vunpack.c.l.b16 %v580
        %v805 = vunpack.c.l.b16 %v581
        %v806 = vunpack.c.l.b16 %v582
        %v807 = vunpack.c.l.b16 %v583
        %v808 = vunpack.c.l.b16 %v584
        %v809 = vunpack.c.l.b16 %v585
        %v810 = vunpack.c.l.b16 %v586
        %v811 = vunpack.c.l.b16 %v587
        %v812 = vunpack.c.l.b16 %v588
        %v813 = vunpack.c.l.b16 %v589
        %v814 = vunpack.c.l.b16 %v590
        %v815 = vunpack.c.l.b16 %v591
        %v816 = vunpack.c.l.b16 %v592
        %v817 = vunpack.c.l.b16 %v593
        %v818 = vunpack.c.l.b16 %v594
        %v819 = vunpack.c.l.b16 %v595
        %v820 = vunpack.c.l.b16 %v596
        %v821 = vpack.c.b16 %v790, %v789
        %v822 = vpack.c.b16 %v792, %v791
        %v823 = vpack.c.b16 %v794, %v793
        %v824 = vpack.c.b16 %v796, %v795
        %v825 = vpack.c.b16 %v798, %v797
        %v826 = vpack.c.b16 %v800, %v799
        %v827 = vpack.c.b16 %v802, %v801
        %v828 = vpack.c.b16 %v804, %v803
        %v829 = vpack.c.b16 %v806, %v805
        %v830 = vpack.c.b16 %v808, %v807
        %v831 = vpack.c.b16 %v810, %v809
        %v832 = vpack.c.b16 %v812, %v811
        %v833 = vpack.c.b16 %v814, %v813
        %v834 = vpack.c.b16 %v816, %v815
        %v835 = vpack.c.b16 %v818, %v817
        %v836 = vpack.c.b16 %v820, %v819
        %853 = vmatpush.bf16.msra.mxu0 %v828
        %854 = vmatpush.bf16.msra.mxu0 %v827
        %855 = vmatpush.bf16.msra.mxu0 %v826
        %856 = vmatpush.bf16.msra.mxu0 %v825
        %857 = vmatpush.bf16.msra.mxu0 %v824
        %858 = vmatpush.bf16.msra.mxu0 %v823
        %859 = vmatpush.bf16.msra.mxu0 %v822
        %860 = vmatpush.bf16.msra.mxu0 %v821
        %861 = vmatmul.bf16.gmra.mxu0 %v693
        %v862 = vpop.f32.mrf.mxu0
        %v863 = vadd.f32 0.0, %v862
        %v864 = vpop.f32.mrf.mxu0
        %v865 = vadd.f32 0.0, %v864
        %866 = vmatmul.bf16.gmra.mxu0 %v695
        %v867 = vpop.f32.mrf.mxu0
        %v868 = vadd.f32 0.0, %v867
        %v869 = vpop.f32.mrf.mxu0
        %v870 = vadd.f32 0.0, %v869
        %871 = vmatmul.bf16.gmra.mxu0 %v697
        %v872 = vpop.f32.mrf.mxu0
        %v873 = vadd.f32 0.0, %v872
        %v874 = vpop.f32.mrf.mxu0
        %v875 = vadd.f32 0.0, %v874
        %876 = vmatmul.bf16.gmra.mxu0 %v699
        %v877 = vpop.f32.mrf.mxu0
        %v878 = vadd.f32 0.0, %v877
        %v879 = vpop.f32.mrf.mxu0
        %v880 = vadd.f32 0.0, %v879
        %881 = vmatmul.bf16.gmra.mxu0 %v701
        %v882 = vpop.f32.mrf.mxu0
        %v883 = vadd.f32 0.0, %v882
        %v884 = vpop.f32.mrf.mxu0
        %v885 = vadd.f32 0.0, %v884
        %886 = vmatmul.bf16.gmra.mxu0 %v703
        %v887 = vpop.f32.mrf.mxu0
        %v888 = vadd.f32 0.0, %v887
        %v889 = vpop.f32.mrf.mxu0
        %v890 = vadd.f32 0.0, %v889
        %891 = vmatmul.bf16.gmra.mxu0 %v705
        %v892 = vpop.f32.mrf.mxu0
        %v893 = vadd.f32 0.0, %v892
        %v894 = vpop.f32.mrf.mxu0
        %v895 = vadd.f32 0.0, %v894
        %896 = vmatmul.bf16.gmra.mxu0 %v707
        %v897 = vpop.f32.mrf.mxu0
        %v898 = vadd.f32 0.0, %v897
        %v899 = vpop.f32.mrf.mxu0
        %v900 = vadd.f32 0.0, %v899
        %901 = vmatmul.bf16.gmra.mxu0 %v709
        %v902 = vpop.f32.mrf.mxu0
        %v903 = vadd.f32 0.0, %v902
        %v904 = vpop.f32.mrf.mxu0
        %v905 = vadd.f32 0.0, %v904
        %906 = vmatmul.bf16.gmra.mxu0 %v711
        %v907 = vpop.f32.mrf.mxu0
        %v908 = vadd.f32 0.0, %v907
        %v909 = vpop.f32.mrf.mxu0
        %v910 = vadd.f32 0.0, %v909
        %911 = vmatmul.bf16.gmra.mxu0 %v713
        %v912 = vpop.f32.mrf.mxu0
        %v913 = vadd.f32 0.0, %v912
        %v914 = vpop.f32.mrf.mxu0
        %v915 = vadd.f32 0.0, %v914
        %916 = vmatmul.bf16.gmra.mxu0 %v715
        %v917 = vpop.f32.mrf.mxu0
        %v918 = vadd.f32 0.0, %v917
        %v919 = vpop.f32.mrf.mxu0
        %v920 = vadd.f32 0.0, %v919
        %921 = vmatmul.bf16.gmra.mxu0 %v717
        %v922 = vpop.f32.mrf.mxu0
        %v923 = vadd.f32 0.0, %v922
        %v924 = vpop.f32.mrf.mxu0
        %v925 = vadd.f32 0.0, %v924
        %926 = vmatmul.bf16.gmra.mxu0 %v719
        %v927 = vpop.f32.mrf.mxu0
        %v928 = vadd.f32 0.0, %v927
        %v929 = vpop.f32.mrf.mxu0
        %v930 = vadd.f32 0.0, %v929
        %931 = vmatmul.bf16.gmra.mxu0 %v721
        %v932 = vpop.f32.mrf.mxu0
        %v933 = vadd.f32 0.0, %v932
        %v934 = vpop.f32.mrf.mxu0
        %v935 = vadd.f32 0.0, %v934
        %936 = vmatmul.bf16.gmra.mxu0 %v723
        %v937 = vpop.f32.mrf.mxu0
        %v938 = vadd.f32 0.0, %v937
        %v939 = vpop.f32.mrf.mxu0
        %v940 = vadd.f32 0.0, %v939
        %941 = vdwg.mxu0
        %942 = vmatpush.bf16.msra.mxu0 %v836
        %943 = vmatpush.bf16.msra.mxu0 %v835
        %944 = vmatpush.bf16.msra.mxu0 %v834
        %945 = vmatpush.bf16.msra.mxu0 %v833
        %946 = vmatpush.bf16.msra.mxu0 %v832
        %947 = vmatpush.bf16.msra.mxu0 %v831
        %948 = vmatpush.bf16.msra.mxu0 %v830
        %949 = vmatpush.bf16.msra.mxu0 %v829
        %950 = vmatmul.bf16.gmra.mxu0 %v694
        %v951 = vpop.f32.mrf.mxu0
        %v952 = vadd.f32 %v863, %v951
        %v953 = vpop.f32.mrf.mxu0
        %v954 = vadd.f32 %v865, %v953
        %955 = vmatmul.bf16.gmra.mxu0 %v696
        %v956 = vpop.f32.mrf.mxu0
        %v957 = vadd.f32 %v868, %v956
        %v958 = vpop.f32.mrf.mxu0
        %v959 = vadd.f32 %v870, %v958
        %960 = vmatmul.bf16.gmra.mxu0 %v698
        %v961 = vpop.f32.mrf.mxu0
        %v962 = vadd.f32 %v873, %v961
        %v963 = vpop.f32.mrf.mxu0
        %v964 = vadd.f32 %v875, %v963
        %965 = vmatmul.bf16.gmra.mxu0 %v700
        %v966 = vpop.f32.mrf.mxu0
        %v967 = vadd.f32 %v878, %v966
        %v968 = vpop.f32.mrf.mxu0
        %v969 = vadd.f32 %v880, %v968
        %970 = vmatmul.bf16.gmra.mxu0 %v702
        %v971 = vpop.f32.mrf.mxu0
        %v972 = vadd.f32 %v883, %v971
        %v973 = vpop.f32.mrf.mxu0
        %v974 = vadd.f32 %v885, %v973
        %975 = vmatmul.bf16.gmra.mxu0 %v704
        %v976 = vpop.f32.mrf.mxu0
        %v977 = vadd.f32 %v888, %v976
        %v978 = vpop.f32.mrf.mxu0
        %v979 = vadd.f32 %v890, %v978
        %980 = vmatmul.bf16.gmra.mxu0 %v706
        %v981 = vpop.f32.mrf.mxu0
        %v982 = vadd.f32 %v893, %v981
        %v983 = vpop.f32.mrf.mxu0
        %v984 = vadd.f32 %v895, %v983
        %985 = vmatmul.bf16.gmra.mxu0 %v708
        %v986 = vpop.f32.mrf.mxu0
        %v987 = vadd.f32 %v898, %v986
        %v988 = vpop.f32.mrf.mxu0
        %v989 = vadd.f32 %v900, %v988
        %990 = vmatmul.bf16.gmra.mxu0 %v710
        %v991 = vpop.f32.mrf.mxu0
        %v992 = vadd.f32 %v903, %v991
        %v993 = vpop.f32.mrf.mxu0
        %v994 = vadd.f32 %v905, %v993
        %995 = vmatmul.bf16.gmra.mxu0 %v712
        %v996 = vpop.f32.mrf.mxu0
        %v997 = vadd.f32 %v908, %v996
        %v998 = vpop.f32.mrf.mxu0
        %v999 = vadd.f32 %v910, %v998
        %1000 = vmatmul.bf16.gmra.mxu0 %v714
        %v1001 = vpop.f32.mrf.mxu0
        %v1002 = vadd.f32 %v913, %v1001
        %v1003 = vpop.f32.mrf.mxu0
        %v1004 = vadd.f32 %v915, %v1003
        %1005 = vmatmul.bf16.gmra.mxu0 %v716
        %v1006 = vpop.f32.mrf.mxu0
        %v1007 = vadd.f32 %v918, %v1006
        %v1008 = vpop.f32.mrf.mxu0
        %v1009 = vadd.f32 %v920, %v1008
        %1010 = vmatmul.bf16.gmra.mxu0 %v718
        %v1011 = vpop.f32.mrf.mxu0
        %v1012 = vadd.f32 %v923, %v1011
        %v1013 = vpop.f32.mrf.mxu0
        %v1014 = vadd.f32 %v925, %v1013
        %1015 = vmatmul.bf16.gmra.mxu0 %v720
        %v1016 = vpop.f32.mrf.mxu0
        %v1017 = vadd.f32 %v928, %v1016
        %v1018 = vpop.f32.mrf.mxu0
        %v1019 = vadd.f32 %v930, %v1018
        %1020 = vmatmul.bf16.gmra.mxu0 %v722
        %v1021 = vpop.f32.mrf.mxu0
        %v1022 = vadd.f32 %v933, %v1021
        %v1023 = vpop.f32.mrf.mxu0
        %v1024 = vadd.f32 %v935, %v1023
        %1025 = vmatmul.bf16.gmra.mxu0 %v724
        %v1026 = vpop.f32.mrf.mxu0
        %v1027 = vadd.f32 %v938, %v1026
        %v1028 = vpop.f32.mrf.mxu0
        %v1029 = vadd.f32 %v940, %v1028
        %1030 = vdwg.mxu0
        %v1031 = vadd.f32 %v501, %v952
        %v1032 = vadd.f32 %v502, %v954
        %v1033 = vadd.f32 %v503, %v957
        %v1034 = vadd.f32 %v504, %v959
        %v1035 = vadd.f32 %v505, %v962
        %v1036 = vadd.f32 %v506, %v964
        %v1037 = vadd.f32 %v507, %v967
        %v1038 = vadd.f32 %v508, %v969
        %v1039 = vadd.f32 %v509, %v972
        %v1040 = vadd.f32 %v510, %v974
        %v1041 = vadd.f32 %v511, %v977
        %v1042 = vadd.f32 %v512, %v979
        %v1043 = vadd.f32 %v513, %v982
        %v1044 = vadd.f32 %v514, %v984
        %v1045 = vadd.f32 %v515, %v987
        %v1046 = vadd.f32 %v516, %v989
        %v1047 = vadd.f32 %v517, %v992
        %v1048 = vadd.f32 %v518, %v994
        %v1049 = vadd.f32 %v519, %v997
        %v1050 = vadd.f32 %v520, %v999
        %v1051 = vadd.f32 %v521, %v1002
        %v1052 = vadd.f32 %v522, %v1004
        %v1053 = vadd.f32 %v523, %v1007
        %v1054 = vadd.f32 %v524, %v1009
        %v1055 = vadd.f32 %v525, %v1012
        %v1056 = vadd.f32 %v526, %v1014
        %v1057 = vadd.f32 %v527, %v1017
        %v1058 = vadd.f32 %v528, %v1019
        %v1059 = vadd.f32 %v529, %v1022
        %v1060 = vadd.f32 %v530, %v1024
        %v1061 = vadd.f32 %v531, %v1027
        %v1062 = vadd.f32 %v532, %v1029
        %vm1063 = vcmask 7168
        %1064 = vst.msk [vmem:[#allocation2] sm:$0xff] %vm1063, %v1031
        %1065 = vst.msk [vmem:[#allocation2 + $0x8] sm:$0xff] %vm1063, %v1032
        %1066 = vst.msk [vmem:[#allocation2 + $0x10] sm:$0xff] %vm1063, %v1033
        %1067 = vst.msk [vmem:[#allocation2 + $0x18] sm:$0xff] %vm1063, %v1034
        %1068 = vst.msk [vmem:[#allocation2 + $0x20] sm:$0xff] %vm1063, %v1035
        %1069 = vst.msk [vmem:[#allocation2 + $0x28] sm:$0xff] %vm1063, %v1036
        %1070 = vst.msk [vmem:[#allocation2 + $0x30] sm:$0xff] %vm1063, %v1037
        %1071 = vst.msk [vmem:[#allocation2 + $0x38] sm:$0xff] %vm1063, %v1038
        %1072 = vst.msk [vmem:[#allocation2 + $0x40] sm:$0xff] %vm1063, %v1039
        %1073 = vst.msk [vmem:[#allocation2 + $0x48] sm:$0xff] %vm1063, %v1040
        %1074 = vst.msk [vmem:[#allocation2 + $0x50] sm:$0xff] %vm1063, %v1041
        %1075 = vst.msk [vmem:[#allocation2 + $0x58] sm:$0xff] %vm1063, %v1042
        %1076 = vst.msk [vmem:[#allocation2 + $0x60] sm:$0xff] %vm1063, %v1043
        %1077 = vst.msk [vmem:[#allocation2 + $0x68] sm:$0xff] %vm1063, %v1044
        %1078 = vst.msk [vmem:[#allocation2 + $0x70] sm:$0xff] %vm1063, %v1045
        %1079 = vst.msk [vmem:[#allocation2 + $0x78] sm:$0xff] %vm1063, %v1046
        %1080 = vst.msk [vmem:[#allocation2 + $0x80] sm:$0xff] %vm1063, %v1047
        %1081 = vst.msk [vmem:[#allocation2 + $0x88] sm:$0xff] %vm1063, %v1048
        %1082 = vst.msk [vmem:[#allocation2 + $0x90] sm:$0xff] %vm1063, %v1049
        %1083 = vst.msk [vmem:[#allocation2 + $0x98] sm:$0xff] %vm1063, %v1050
        %1084 = vst.msk [vmem:[#allocation2 + $0xa0] sm:$0xff] %vm1063, %v1051
        %1085 = vst.msk [vmem:[#allocation2 + $0xa8] sm:$0xff] %vm1063, %v1052
        %1086 = vst.msk [vmem:[#allocation2 + $0xb0] sm:$0xff] %vm1063, %v1053
        %1087 = vst.msk [vmem:[#allocation2 + $0xb8] sm:$0xff] %vm1063, %v1054
        %1088 = vst.msk [vmem:[#allocation2 + $0xc0] sm:$0xff] %vm1063, %v1055
        %1089 = vst.msk [vmem:[#allocation2 + $0xc8] sm:$0xff] %vm1063, %v1056
        %1090 = vst.msk [vmem:[#allocation2 + $0xd0] sm:$0xff] %vm1063, %v1057
        %1091 = vst.msk [vmem:[#allocation2 + $0xd8] sm:$0xff] %vm1063, %v1058
        %1092 = vst.msk [vmem:[#allocation2 + $0xe0] sm:$0xff] %vm1063, %v1059
        %1093 = vst.msk [vmem:[#allocation2 + $0xe8] sm:$0xff] %vm1063, %v1060
        %1094 = vst.msk [vmem:[#allocation2 + $0xf0] sm:$0xff] %vm1063, %v1061
        %1095 = vst.msk [vmem:[#allocation2 + $0xf8] sm:$0xff] %vm1063, %v1062
        %p1096 = scmp.eq.s32.totalorder %s23, 1
        // Predicated region
        $region79: #{conv_pool_block.3} parent=69 // pred_check
          %p1097 = pneg %p1096
        $region80: #{conv_pool_block.3} parent=69 // pred_check_branch
          %1099 = sbr.rel (%p1097) target = $region82
        $region81: #{conv_pool_block.3} parent=69 // pred_region
          %v1100 = vld [vmem:[#allocation2] sm:$0xff]
          %v1101 = vld [vmem:[#allocation2 + $0x8] sm:$0xff]
          %v1102 = vld [vmem:[#allocation2 + $0x10] sm:$0xff]
          %v1103 = vld [vmem:[#allocation2 + $0x18] sm:$0xff]
          %v1104 = vld [vmem:[#allocation2 + $0x20] sm:$0xff]
          %v1105 = vld [vmem:[#allocation2 + $0x28] sm:$0xff]
          %v1106 = vld [vmem:[#allocation2 + $0x30] sm:$0xff]
          %v1107 = vld [vmem:[#allocation2 + $0x38] sm:$0xff]
          %v1108 = vld [vmem:[#allocation2 + $0x40] sm:$0xff]
          %v1109 = vld [vmem:[#allocation2 + $0x48] sm:$0xff]
          %v1110 = vld [vmem:[#allocation2 + $0x50] sm:$0xff]
          %v1111 = vld [vmem:[#allocation2 + $0x58] sm:$0xff]
          %v1112 = vld [vmem:[#allocation2 + $0x60] sm:$0xff]
          %v1113 = vld [vmem:[#allocation2 + $0x68] sm:$0xff]
          %v1114 = vld [vmem:[#allocation2 + $0x70] sm:$0xff]
          %v1115 = vld [vmem:[#allocation2 + $0x78] sm:$0xff]
          %v1116 = vld [vmem:[#allocation2 + $0x80] sm:$0xff]
          %v1117 = vld [vmem:[#allocation2 + $0x88] sm:$0xff]
          %v1118 = vld [vmem:[#allocation2 + $0x90] sm:$0xff]
          %v1119 = vld [vmem:[#allocation2 + $0x98] sm:$0xff]
          %v1120 = vld [vmem:[#allocation2 + $0xa0] sm:$0xff]
          %v1121 = vld [vmem:[#allocation2 + $0xa8] sm:$0xff]
          %v1122 = vld [vmem:[#allocation2 + $0xb0] sm:$0xff]
          %v1123 = vld [vmem:[#allocation2 + $0xb8] sm:$0xff]
          %v1124 = vld [vmem:[#allocation2 + $0xc0] sm:$0xff]
          %v1125 = vld [vmem:[#allocation2 + $0xc8] sm:$0xff]
          %v1126 = vld [vmem:[#allocation2 + $0xd0] sm:$0xff]
          %v1127 = vld [vmem:[#allocation2 + $0xd8] sm:$0xff]
          %v1128 = vld [vmem:[#allocation2 + $0xe0] sm:$0xff]
          %v1129 = vld [vmem:[#allocation2 + $0xe8] sm:$0xff]
          %v1130 = vld [vmem:[#allocation2 + $0xf0] sm:$0xff]
          %v1131 = vld [vmem:[#allocation2 + $0xf8] sm:$0xff]
          %s1132 = sld [smem:[#allocation3]]
          %v1133 = vstv %s1132
          %v1134 = vadd.f32 %v1100, %v1133
          %v1135 = vadd.f32 %v1101, %v1133
          %v1136 = vadd.f32 %v1102, %v1133
          %v1137 = vadd.f32 %v1103, %v1133
          %v1138 = vadd.f32 %v1104, %v1133
          %v1139 = vadd.f32 %v1105, %v1133
          %v1140 = vadd.f32 %v1106, %v1133
          %v1141 = vadd.f32 %v1107, %v1133
          %v1142 = vadd.f32 %v1108, %v1133
          %v1143 = vadd.f32 %v1109, %v1133
          %v1144 = vadd.f32 %v1110, %v1133
          %v1145 = vadd.f32 %v1111, %v1133
          %v1146 = vadd.f32 %v1112, %v1133
          %v1147 = vadd.f32 %v1113, %v1133
          %v1148 = vadd.f32 %v1114, %v1133
          %v1149 = vadd.f32 %v1115, %v1133
          %v1150 = vadd.f32 %v1116, %v1133
          %v1151 = vadd.f32 %v1117, %v1133
          %v1152 = vadd.f32 %v1118, %v1133
          %v1153 = vadd.f32 %v1119, %v1133
          %v1154 = vadd.f32 %v1120, %v1133
          %v1155 = vadd.f32 %v1121, %v1133
          %v1156 = vadd.f32 %v1122, %v1133
          %v1157 = vadd.f32 %v1123, %v1133
          %v1158 = vadd.f32 %v1124, %v1133
          %v1159 = vadd.f32 %v1125, %v1133
          %v1160 = vadd.f32 %v1126, %v1133
          %v1161 = vadd.f32 %v1127, %v1133
          %v1162 = vadd.f32 %v1128, %v1133
          %v1163 = vadd.f32 %v1129, %v1133
          %v1164 = vadd.f32 %v1130, %v1133
          %v1165 = vadd.f32 %v1131, %v1133
          %1166 = vst.msk [vmem:[%s462] sm:$0xff] %vm1063, %v1134
          %1167 = vst.msk [vmem:[%s462 + $0x8] sm:$0xff] %vm1063, %v1135
          %1168 = vst.msk [vmem:[%s462 + $0x10] sm:$0xff] %vm1063, %v1136
          %1169 = vst.msk [vmem:[%s462 + $0x18] sm:$0xff] %vm1063, %v1137
          %1170 = vst.msk [vmem:[%s462 + $0x20] sm:$0xff] %vm1063, %v1138
          %1171 = vst.msk [vmem:[%s462 + $0x28] sm:$0xff] %vm1063, %v1139
          %1172 = vst.msk [vmem:[%s462 + $0x30] sm:$0xff] %vm1063, %v1140
          %1173 = vst.msk [vmem:[%s462 + $0x38] sm:$0xff] %vm1063, %v1141
          %1174 = vst.msk [vmem:[%s462 + $0x40] sm:$0xff] %vm1063, %v1142
          %1175 = vst.msk [vmem:[%s462 + $0x48] sm:$0xff] %vm1063, %v1143
          %1176 = vst.msk [vmem:[%s462 + $0x50] sm:$0xff] %vm1063, %v1144
          %1177 = vst.msk [vmem:[%s462 + $0x58] sm:$0xff] %vm1063, %v1145
          %1178 = vst.msk [vmem:[%s462 + $0x60] sm:$0xff] %vm1063, %v1146
          %1179 = vst.msk [vmem:[%s462 + $0x68] sm:$0xff] %vm1063, %v1147
          %1180 = vst.msk [vmem:[%s462 + $0x70] sm:$0xff] %vm1063, %v1148
          %1181 = vst.msk [vmem:[%s462 + $0x78] sm:$0xff] %vm1063, %v1149
          %1182 = vst.msk [vmem:[%s462 + $0x80] sm:$0xff] %vm1063, %v1150
          %1183 = vst.msk [vmem:[%s462 + $0x88] sm:$0xff] %vm1063, %v1151
          %1184 = vst.msk [vmem:[%s462 + $0x90] sm:$0xff] %vm1063, %v1152
          %1185 = vst.msk [vmem:[%s462 + $0x98] sm:$0xff] %vm1063, %v1153
          %1186 = vst.msk [vmem:[%s462 + $0xa0] sm:$0xff] %vm1063, %v1154
          %1187 = vst.msk [vmem:[%s462 + $0xa8] sm:$0xff] %vm1063, %v1155
          %1188 = vst.msk [vmem:[%s462 + $0xb0] sm:$0xff] %vm1063, %v1156
          %1189 = vst.msk [vmem:[%s462 + $0xb8] sm:$0xff] %vm1063, %v1157
          %1190 = vst.msk [vmem:[%s462 + $0xc0] sm:$0xff] %vm1063, %v1158
          %1191 = vst.msk [vmem:[%s462 + $0xc8] sm:$0xff] %vm1063, %v1159
          %1192 = vst.msk [vmem:[%s462 + $0xd0] sm:$0xff] %vm1063, %v1160
          %1193 = vst.msk [vmem:[%s462 + $0xd8] sm:$0xff] %vm1063, %v1161
          %1194 = vst.msk [vmem:[%s462 + $0xe0] sm:$0xff] %vm1063, %v1162
          %1195 = vst.msk [vmem:[%s462 + $0xe8] sm:$0xff] %vm1063, %v1163
          %1196 = vst.msk [vmem:[%s462 + $0xf0] sm:$0xff] %vm1063, %v1164
          %1197 = vst.msk [vmem:[%s462 + $0xf8] sm:$0xff] %vm1063, %v1165
          %v1198 = vld [vmem:[%s450] sm:$0xff]
          %v1199 = vld [vmem:[%s450 + $0x8] sm:$0xff]
          %v1200 = vld [vmem:[%s450 + $0x10] sm:$0xff]
          %v1201 = vld [vmem:[%s450 + $0x18] sm:$0xff]
          %v1202 = vld [vmem:[%s450 + $0x20] sm:$0xff]
          %v1203 = vld [vmem:[%s450 + $0x28] sm:$0xff]
          %v1204 = vld [vmem:[%s450 + $0x30] sm:$0xff]
          %v1205 = vld [vmem:[%s450 + $0x38] sm:$0xff]
          %v1206 = vld [vmem:[%s450 + $0x40] sm:$0xff]
          %v1207 = vld [vmem:[%s450 + $0x48] sm:$0xff]
          %v1208 = vld [vmem:[%s450 + $0x50] sm:$0xff]
          %v1209 = vld [vmem:[%s450 + $0x58] sm:$0xff]
          %v1210 = vld [vmem:[%s450 + $0x60] sm:$0xff]
          %v1211 = vld [vmem:[%s450 + $0x68] sm:$0xff]
          %v1212 = vld [vmem:[%s450 + $0x70] sm:$0xff]
          %v1213 = vld [vmem:[%s450 + $0x78] sm:$0xff]
          %v1214 = vld [vmem:[%s450 + $0x80] sm:$0xff]
          %v1215 = vld [vmem:[%s450 + $0x88] sm:$0xff]
          %v1216 = vld [vmem:[%s450 + $0x90] sm:$0xff]
          %v1217 = vld [vmem:[%s450 + $0x98] sm:$0xff]
          %v1218 = vld [vmem:[%s450 + $0xa0] sm:$0xff]
          %v1219 = vld [vmem:[%s450 + $0xa8] sm:$0xff]
          %v1220 = vld [vmem:[%s450 + $0xb0] sm:$0xff]
          %v1221 = vld [vmem:[%s450 + $0xb8] sm:$0xff]
          %v1222 = vld [vmem:[%s450 + $0xc0] sm:$0xff]
          %v1223 = vld [vmem:[%s450 + $0xc8] sm:$0xff]
          %v1224 = vld [vmem:[%s450 + $0xd0] sm:$0xff]
          %v1225 = vld [vmem:[%s450 + $0xd8] sm:$0xff]
          %v1226 = vld [vmem:[%s450 + $0xe0] sm:$0xff]
          %v1227 = vld [vmem:[%s450 + $0xe8] sm:$0xff]
          %v1228 = vld [vmem:[%s450 + $0xf0] sm:$0xff]
          %v1229 = vld [vmem:[%s450 + $0xf8] sm:$0xff]
          %v1230 = vtanh.pop %v1134
          %v1231 = vtanh.pop %v1135
          %v1232 = vtanh.pop %v1136
          %v1233 = vtanh.pop %v1137
          %v1234 = vtanh.pop %v1138
          %v1235 = vtanh.pop %v1139
          %v1236 = vtanh.pop %v1140
          %v1237 = vtanh.pop %v1141
          %v1238 = vtanh.pop %v1142
          %v1239 = vtanh.pop %v1143
          %v1240 = vtanh.pop %v1144
          %v1241 = vtanh.pop %v1145
          %v1242 = vtanh.pop %v1146
          %v1243 = vtanh.pop %v1147
          %v1244 = vtanh.pop %v1148
          %v1245 = vtanh.pop %v1149
          %v1246 = vtanh.pop %v1150
          %v1247 = vtanh.pop %v1151
          %v1248 = vtanh.pop %v1152
          %v1249 = vtanh.pop %v1153
          %v1250 = vtanh.pop %v1154
          %v1251 = vtanh.pop %v1155
          %v1252 = vtanh.pop %v1156
          %v1253 = vtanh.pop %v1157
          %v1254 = vtanh.pop %v1158
          %v1255 = vtanh.pop %v1159
          %v1256 = vtanh.pop %v1160
          %v1257 = vtanh.pop %v1161
          %v1258 = vtanh.pop %v1162
          %v1259 = vtanh.pop %v1163
          %v1260 = vtanh.pop %v1164
          %v1261 = vtanh.pop %v1165
          %1263 = vset.pattern.permute.xlu0 0
          %1264 = vperm.xlu0 %1263, %v1230
          %v1265 = vpop.permute.xlu0 %1264
          %1268 = vset.pattern.permute.xlu0 0
          %1269 = vperm.xlu0 %1268, %v1231
          %v1270 = vpop.permute.xlu0 %1269
          %1273 = vset.pattern.permute.xlu0 0
          %1274 = vperm.xlu0 %1273, %v1232
          %v1275 = vpop.permute.xlu0 %1274
          %1278 = vset.pattern.permute.xlu0 0
          %1279 = vperm.xlu0 %1278, %v1233
          %v1280 = vpop.permute.xlu0 %1279
          %1283 = vset.pattern.permute.xlu0 0
          %1284 = vperm.xlu0 %1283, %v1234
          %v1285 = vpop.permute.xlu0 %1284
          %1288 = vset.pattern.permute.xlu0 0
          %1289 = vperm.xlu0 %1288, %v1235
          %v1290 = vpop.permute.xlu0 %1289
          %1293 = vset.pattern.permute.xlu0 0
          %1294 = vperm.xlu0 %1293, %v1236
          %v1295 = vpop.permute.xlu0 %1294
          %1298 = vset.pattern.permute.xlu0 0
          %1299 = vperm.xlu0 %1298, %v1237
          %v1300 = vpop.permute.xlu0 %1299
          %1303 = vset.pattern.permute.xlu0 0
          %1304 = vperm.xlu0 %1303, %v1238
          %v1305 = vpop.permute.xlu0 %1304
          %1308 = vset.pattern.permute.xlu0 0
          %1309 = vperm.xlu0 %1308, %v1239
          %v1310 = vpop.permute.xlu0 %1309
          %1313 = vset.pattern.permute.xlu0 0
          %1314 = vperm.xlu0 %1313, %v1240
          %v1315 = vpop.permute.xlu0 %1314
          %1318 = vset.pattern.permute.xlu0 0
          %1319 = vperm.xlu0 %1318, %v1241
          %v1320 = vpop.permute.xlu0 %1319
          %1323 = vset.pattern.permute.xlu0 0
          %1324 = vperm.xlu0 %1323, %v1242
          %v1325 = vpop.permute.xlu0 %1324
          %1328 = vset.pattern.permute.xlu0 0
          %1329 = vperm.xlu0 %1328, %v1243
          %v1330 = vpop.permute.xlu0 %1329
          %1333 = vset.pattern.permute.xlu0 0
          %1334 = vperm.xlu0 %1333, %v1244
          %v1335 = vpop.permute.xlu0 %1334
          %1338 = vset.pattern.permute.xlu0 0
          %1339 = vperm.xlu0 %1338, %v1245
          %v1340 = vpop.permute.xlu0 %1339
          %1343 = vset.pattern.permute.xlu0 0
          %1344 = vperm.xlu0 %1343, %v1246
          %v1345 = vpop.permute.xlu0 %1344
          %1348 = vset.pattern.permute.xlu0 0
          %1349 = vperm.xlu0 %1348, %v1247
          %v1350 = vpop.permute.xlu0 %1349
          %1353 = vset.pattern.permute.xlu0 0
          %1354 = vperm.xlu0 %1353, %v1248
          %v1355 = vpop.permute.xlu0 %1354
          %1358 = vset.pattern.permute.xlu0 0
          %1359 = vperm.xlu0 %1358, %v1249
          %v1360 = vpop.permute.xlu0 %1359
          %1363 = vset.pattern.permute.xlu0 0
          %1364 = vperm.xlu0 %1363, %v1250
          %v1365 = vpop.permute.xlu0 %1364
          %1368 = vset.pattern.permute.xlu0 0
          %1369 = vperm.xlu0 %1368, %v1251
          %v1370 = vpop.permute.xlu0 %1369
          %1373 = vset.pattern.permute.xlu0 0
          %1374 = vperm.xlu0 %1373, %v1252
          %v1375 = vpop.permute.xlu0 %1374
          %1378 = vset.pattern.permute.xlu0 0
          %1379 = vperm.xlu0 %1378, %v1253
          %v1380 = vpop.permute.xlu0 %1379
          %1383 = vset.pattern.permute.xlu0 0
          %1384 = vperm.xlu0 %1383, %v1254
          %v1385 = vpop.permute.xlu0 %1384
          %1388 = vset.pattern.permute.xlu0 0
          %1389 = vperm.xlu0 %1388, %v1255
          %v1390 = vpop.permute.xlu0 %1389
          %1393 = vset.pattern.permute.xlu0 0
          %1394 = vperm.xlu0 %1393, %v1256
          %v1395 = vpop.permute.xlu0 %1394
          %1398 = vset.pattern.permute.xlu0 0
          %1399 = vperm.xlu0 %1398, %v1257
          %v1400 = vpop.permute.xlu0 %1399
          %1403 = vset.pattern.permute.xlu0 0
          %1404 = vperm.xlu0 %1403, %v1258
          %v1405 = vpop.permute.xlu0 %1404
          %1408 = vset.pattern.permute.xlu0 0
          %1409 = vperm.xlu0 %1408, %v1259
          %v1410 = vpop.permute.xlu0 %1409
          %1413 = vset.pattern.permute.xlu0 0
          %1414 = vperm.xlu0 %1413, %v1260
          %v1415 = vpop.permute.xlu0 %1414
          %1418 = vset.pattern.permute.xlu0 0
          %1419 = vperm.xlu0 %1418, %v1261
          %v1420 = vpop.permute.xlu0 %1419
          %v1422 = vmul.f32 %v1198, %v1265
          %v1423 = vmul.f32 %v1199, %v1270
          %v1424 = vmul.f32 %v1200, %v1275
          %v1425 = vmul.f32 %v1201, %v1280
          %v1426 = vmul.f32 %v1202, %v1285
          %v1427 = vmul.f32 %v1203, %v1290
          %v1428 = vmul.f32 %v1204, %v1295
          %v1429 = vmul.f32 %v1205, %v1300
          %v1430 = vmul.f32 %v1206, %v1305
          %v1431 = vmul.f32 %v1207, %v1310
          %v1432 = vmul.f32 %v1208, %v1315
          %v1433 = vmul.f32 %v1209, %v1320
          %v1434 = vmul.f32 %v1210, %v1325
          %v1435 = vmul.f32 %v1211, %v1330
          %v1436 = vmul.f32 %v1212, %v1335
          %v1437 = vmul.f32 %v1213, %v1340
          %v1438 = vmul.f32 %v1214, %v1345
          %v1439 = vmul.f32 %v1215, %v1350
          %v1440 = vmul.f32 %v1216, %v1355
          %v1441 = vmul.f32 %v1217, %v1360
          %v1442 = vmul.f32 %v1218, %v1365
          %v1443 = vmul.f32 %v1219, %v1370
          %v1444 = vmul.f32 %v1220, %v1375
          %v1445 = vmul.f32 %v1221, %v1380
          %v1446 = vmul.f32 %v1222, %v1385
          %v1447 = vmul.f32 %v1223, %v1390
          %v1448 = vmul.f32 %v1224, %v1395
          %v1449 = vmul.f32 %v1225, %v1400
          %v1450 = vmul.f32 %v1226, %v1405
          %v1451 = vmul.f32 %v1227, %v1410
          %v1452 = vmul.f32 %v1228, %v1415
          %v1453 = vmul.f32 %v1229, %v1420
          %1454 = vst [vmem:[%s456] sm:$0xff] %v1422
          %1455 = vst [vmem:[%s456 + $0x8] sm:$0xff] %v1423
          %1456 = vst [vmem:[%s456 + $0x10] sm:$0xff] %v1424
          %1457 = vst [vmem:[%s456 + $0x18] sm:$0xff] %v1425
          %1458 = vst [vmem:[%s456 + $0x20] sm:$0xff] %v1426
          %1459 = vst [vmem:[%s456 + $0x28] sm:$0xff] %v1427
          %1460 = vst [vmem:[%s456 + $0x30] sm:$0xff] %v1428
          %1461 = vst [vmem:[%s456 + $0x38] sm:$0xff] %v1429
          %1462 = vst [vmem:[%s456 + $0x40] sm:$0xff] %v1430
          %1463 = vst [vmem:[%s456 + $0x48] sm:$0xff] %v1431
          %1464 = vst [vmem:[%s456 + $0x50] sm:$0xff] %v1432
          %1465 = vst [vmem:[%s456 + $0x58] sm:$0xff] %v1433
          %1466 = vst [vmem:[%s456 + $0x60] sm:$0xff] %v1434
          %1467 = vst [vmem:[%s456 + $0x68] sm:$0xff] %v1435
          %1468 = vst [vmem:[%s456 + $0x70] sm:$0xff] %v1436
          %1469 = vst [vmem:[%s456 + $0x78] sm:$0xff] %v1437
          %1470 = vst [vmem:[%s456 + $0x80] sm:$0xff] %v1438
          %1471 = vst [vmem:[%s456 + $0x88] sm:$0xff] %v1439
          %1472 = vst [vmem:[%s456 + $0x90] sm:$0xff] %v1440
          %1473 = vst [vmem:[%s456 + $0x98] sm:$0xff] %v1441
          %1474 = vst [vmem:[%s456 + $0xa0] sm:$0xff] %v1442
          %1475 = vst [vmem:[%s456 + $0xa8] sm:$0xff] %v1443
          %1476 = vst [vmem:[%s456 + $0xb0] sm:$0xff] %v1444
          %1477 = vst [vmem:[%s456 + $0xb8] sm:$0xff] %v1445
          %1478 = vst [vmem:[%s456 + $0xc0] sm:$0xff] %v1446
          %1479 = vst [vmem:[%s456 + $0xc8] sm:$0xff] %v1447
          %1480 = vst [vmem:[%s456 + $0xd0] sm:$0xff] %v1448
          %1481 = vst [vmem:[%s456 + $0xd8] sm:$0xff] %v1449
          %1482 = vst [vmem:[%s456 + $0xe0] sm:$0xff] %v1450
          %1483 = vst [vmem:[%s456 + $0xe8] sm:$0xff] %v1451
          %1484 = vst [vmem:[%s456 + $0xf0] sm:$0xff] %v1452
          %1485 = vst [vmem:[%s456 + $0xf8] sm:$0xff] %v1453
        $region82: #{conv_pool_block.3} parent=69 // pred_fallthru
          _
        %s1486 = smul.u32 32, %s22
        %p1487 = scmp.lt.s32.totalorder %s1486, 63
        %s1488 = scalar_select %p1487, %s1486, 63
        %s1489 = smul.addr %s1488, 8
        %s1490 = scalar_lea.vmem %s4, %s1489
        %s1491 = smul.u32 32, %s22
        %p1492 = scmp.lt.s32.totalorder %s1491, 63
        %s1493 = scalar_select %p1492, %s1491, 63
        %s1494 = smul.addr %s1493, 8
        %s1495 = scalar_lea.vmem %s5, %s1494
        // Predicated region
        $region83: #{conv_pool_block.3} parent=69 // pred_check
          %p1496 = pneg %p149
        $region84: #{conv_pool_block.3} parent=69 // pred_check_branch
          %1498 = sbr.rel (%p1496) target = $region86
        $region85: #{conv_pool_block.3} parent=69 // pred_region
          %s1499 = smul.u32 32, %s22
        $region86: #{conv_pool_block.3} parent=69 // pred_fallthru
          _
        // Predicated region
        $region87: #{conv_pool_block.3} parent=69 // pred_check
          %p1500 = pneg %p175
        $region88: #{conv_pool_block.3} parent=69 // pred_check_branch
          %1502 = sbr.rel (%p1500) target = $region90
        $region89: #{conv_pool_block.3} parent=69 // pred_region
          %s1503 = smul.u32 32, %s22
        $region90: #{conv_pool_block.3} parent=69 // pred_fallthru
          _
      $region70: #{conv_pool_block.3} parent=5 // pred_fallthru
        _
      %p1504 = scmp.le.s32.totalorder 2, %s13
      // Predicated region
      $region91: #{conv_pool_block.3} parent=5 // pred_check
        %p1505 = pneg %p1504
      $region92: #{conv_pool_block.3} parent=5 // pred_check_branch
        %1507 = sbr.rel (%p1505) target = $region94
      $region93: #{conv_pool_block.3} parent=5 // pred_region
        %s1508 = ssub.s32 %s13, 2
        // Predicated region
        $region95: #{conv_pool_block.3} parent=93 // pred_check
          %p1509 = pneg %p155
        $region96: #{conv_pool_block.3} parent=93 // pred_check_branch
          %1511 = sbr.rel (%p1509) target = $region98
        $region97: #{conv_pool_block.3} parent=93 // pred_region
          %s1512 = smul.u32 32, %s24
          %p1513 = scmp.lt.s32.totalorder %s1512, 63
          %s1514 = scalar_select %p1513, %s1512, 63
          %s1515 = smul.addr %s1514, 8
          %s1516 = scalar_lea.vmem %s4, %s1515
        $region98: #{conv_pool_block.3} parent=93 // pred_fallthru
          _
        // Predicated region
        $region99: #{conv_pool_block.3} parent=93 // pred_check
          %p1517 = pneg %p181
        $region100: #{conv_pool_block.3} parent=93 // pred_check_branch
          %1519 = sbr.rel (%p1517) target = $region102
        $region101: #{conv_pool_block.3} parent=93 // pred_region
          %s1520 = smul.u32 32, %s24
          %p1521 = scmp.lt.s32.totalorder %s1520, 63
          %s1522 = scalar_select %p1521, %s1520, 63
          %s1523 = smul.addr %s1522, 8
          %s1524 = scalar_lea.vmem %s5, %s1523
        $region102: #{conv_pool_block.3} parent=93 // pred_fallthru
          _
      $region94: #{conv_pool_block.3} parent=5 // pred_fallthru
        _
    $region6: #{conv_pool_block.3} parent=1 // loop_footer
      %s17 = sadd.s32 1, %s13
    $region7: #{conv_pool_block.3} parent=1 // loop_footer_branch
      %12 = sbr.rel target = $region3
    $region8: #{conv_pool_block.3} parent=1 // loop_exit
      _

</llo_original>
